<compile_context>
chip_gen: v5e
topology: v5e:2x2
jax: 0.10.0
libtpu: 0.0.40
codegen_flags: <defaults>
</compile_context>

<pallas_src>
import math

import jax
import jax.numpy as jnp
from jax.experimental import pallas as pl
from jax.experimental.pallas import tpu as pltpu

# ----------------------------- model config -----------------------------
B, S = 2, 8          # batch, sequence length
H = 32               # hidden size
NH, DH = 4, 8        # heads, head dim (NH*DH == H)
I = 64               # FFN intermediate size
L = 2                # number of encoder layers
V = 100              # vocab size
P = 16               # max position embeddings
LN_EPS = 1e-12

assert NH * DH == H
assert S & (S - 1) == 0 and DH & (DH - 1) == 0
T = B * S
_S_SHIFT = S.bit_length() - 1
_T_SHIFT = T.bit_length() - 1
_DH_SHIFT = DH.bit_length() - 1
_GELU_C = math.sqrt(2.0 / math.pi)

# Softmax normalization: approx EUP reciprocal (fast, ~free slot) vs exact divide.
_APPROX_RECIPROCAL = True

# Vector-slab layout (all biases / layernorm params, one row each, width 96).
_VW = max(3 * H, I)                    # 96 lanes
_ROW_EMB_G, _ROW_EMB_B = 0, 1
_ROW_LAYER0 = 2
_VROWS_PER_LAYER = 8                   # bqkv, bo, ln1_g, ln1_b, bi, bo2, ln2_g, ln2_b
_ROW_POOLER_B = _ROW_LAYER0 + _VROWS_PER_LAYER * L
_NVEC = _ROW_POOLER_B + 1


# ----------------------------- in-kernel helpers -----------------------------
def _gelu_tanh(x):
    # TODO(synk): HF BERT default intermediate act is exact erf-GELU; tanh
    # approximation kept for Mosaic-friendly lowering.
    return 0.5 * x * (1.0 + jnp.tanh(_GELU_C * (x + 0.044715 * x * x * x)))


def _layernorm(x, gamma, beta):
    mean = jnp.mean(x, axis=-1, keepdims=True)
    xc = x - mean
    var = jnp.mean(xc * xc, axis=-1, keepdims=True)
    return xc * jax.lax.rsqrt(var + LN_EPS) * gamma + beta


# ----------------------------- fused whole-model kernel -----------------------------
def _bert_model_kernel(emb_ref, mask_ref, row_w_ref, wo2_ref, pw_ref, vecs_ref, out_ref):
    scale = 1.0 / math.sqrt(DH)

    def vec(i, n):
        # One bias / LN row from the packed vector slab, as [1, n] f32.
        return vecs_ref[i:i + 1, 0:n]

    # ---- in-register constants (no HBM traffic) ----
    # Block-diagonal ones [NH*T, NH*T]: one matmul broadcasts each head's key-sum
    # to every lane of that head (fused per-head softmax denominator).
    rr = jax.lax.broadcasted_iota(jnp.int32, (NH * T, NH * T), 0) >> _T_SHIFT
    cc = jax.lax.broadcasted_iota(jnp.int32, (NH * T, NH * T), 1) >> _T_SHIFT
    seg = jnp.where(rr == cc, 1.0, 0.0)

    # band_stack[hd*T + j, d] == 1 iff lane d belongs to head hd (zero-pads the
    # head-stacked K/V so one full-H contraction == per-head contractions).
    hrow = jax.lax.broadcasted_iota(jnp.int32, (NH * T, H), 0) >> _T_SHIFT
    hlane = jax.lax.broadcasted_iota(jnp.int32, (NH * T, H), 1) >> _DH_SHIFT
    band_stack = jnp.where(hrow == hlane, 1.0, 0.0).astype(jnp.bfloat16)

    # Additive attention mask [T, NH*T] (mask_ref already tiled across heads):
    # 0 where (same batch AND key not padded), else -10000 (HF convention).
    keymask = mask_ref[...]                                               # [1, NH*T]
    rb = jax.lax.broadcasted_iota(jnp.int32, (T, NH * T), 0) >> _S_SHIFT  # query batch
    cb = (jax.lax.broadcasted_iota(jnp.int32, (T, NH * T), 1) & (T - 1)) >> _S_SHIFT
    add_mask = jnp.where((rb == cb) & (keymask > 0.5), 0.0, -10000.0)

    # ---- embedding layernorm ----
    h = _layernorm(emb_ref[...], vec(_ROW_EMB_G, H), vec(_ROW_EMB_B, H))  # [T, H] f32

    # ---- encoder layers (weights resident in VMEM, loop fully unrolled) ----
    for li in range(L):
        lw = row_w_ref[li]                      # [H, 3H+H+I] bf16
        wqkv = lw[:, 0:3 * H]
        wo = lw[:, 3 * H:4 * H]
        wi = lw[:, 4 * H:4 * H + I]
        wo2 = wo2_ref[li]                       # [I, H] bf16

        base = _ROW_LAYER0 + _VROWS_PER_LAYER * li
        bqkv = vec(base + 0, 3 * H)
        bo = vec(base + 1, H)
        g1, b1 = vec(base + 2, H), vec(base + 3, H)
        bi = vec(base + 4, I)
        bo2 = vec(base + 5, H)
        g2, b2 = vec(base + 6, H), vec(base + 7, H)

        x = h                                                             # [T, H] f32
        qkv = jnp.dot(x.astype(jnp.bfloat16), wqkv,
                      preferred_element_type=jnp.float32) + bqkv          # [T, 3H]
        q = qkv[:, 0:H]
        k = qkv[:, H:2 * H]
        v = qkv[:, 2 * H:3 * H]

        # Head-stacked, band-masked K and V: [NH*T, H] (band applied after bf16 cast;
        # the 0/1 mask is exact in bf16).
        k_stack = jnp.concatenate([k] * NH, axis=0).astype(jnp.bfloat16) * band_stack
        v_stack = jnp.concatenate([v] * NH, axis=0).astype(jnp.bfloat16) * band_stack

        # All heads' scores in ONE dot (contract over H): [T, NH*T].
        s = jax.lax.dot_general(q.astype(jnp.bfloat16), k_stack,
                                dimension_numbers=(((1,), (1,)), ((), ())),
                                preferred_element_type=jnp.float32) * scale
        s = s + add_mask

        # Single softmax pass: global row max is a valid stabilizer for every head;
        # per-head denominators come from one block-diagonal matmul.
        mx = jnp.max(s, axis=-1, keepdims=True)
        e = jnp.exp(s - mx)
        denom = jnp.dot(e, seg, preferred_element_type=jnp.float32)       # [T, NH*T]
        if _APPROX_RECIPROCAL:
            prob = e * pl.reciprocal(denom, approx=True)
        else:
            prob = e / denom

        # All heads' context in ONE dot: [T, NH*T] @ [NH*T, H] -> [T, H].
        ctx = jnp.dot(prob.astype(jnp.bfloat16), v_stack,
                      preferred_element_type=jnp.float32)

        attn_out = jnp.dot(ctx.astype(jnp.bfloat16), wo,
                           preferred_element_type=jnp.float32) + bo
        h1 = _layernorm(attn_out + x, g1, b1)

        ffn = _gelu_tanh(jnp.dot(h1.astype(jnp.bfloat16), wi,
                                 preferred_element_type=jnp.float32) + bi)
        ffn_out = jnp.dot(ffn.astype(jnp.bfloat16), wo2,
                          preferred_element_type=jnp.float32) + bo2
        h = _layernorm(ffn_out + h1, g2, b2)

    # ---- pooler + classifier tanh (kernel epilogue) ----
    # CLS rows gathered with a tiny f32 selection matmul (exact gather, lane-dense).
    rowb = jax.lax.broadcasted_iota(jnp.int32, (B, T), 0)
    colt = jax.lax.broadcasted_iota(jnp.int32, (B, T), 1)
    sel = jnp.where(colt == rowb * S, 1.0, 0.0)                           # [B, T]
    cls = jnp.dot(sel, h, preferred_element_type=jnp.float32)             # [B, H]
    pooled = jnp.tanh(jnp.dot(cls.astype(jnp.bfloat16), pw_ref[...],
                              preferred_element_type=jnp.float32)
                      + vec(_ROW_POOLER_B, H))
    out_ref[...] = jnp.tanh(pooled)


def _full_spec(arr):
    zeros = (0,) * arr.ndim
    return pl.BlockSpec(arr.shape, lambda i, _z=zeros: _z)


# ----------------------------- parameter init & packing -----------------------------
def init_params(key):
    def nrm(k, shape):
        return 0.02 * jax.random.normal(k, shape, dtype=jnp.float32)

    keys = jax.random.split(key, 4 + L)
    params = {
        'word_emb': nrm(keys[0], (V, H)),
        'pos_emb': nrm(keys[1], (P, H)),
        'tok_emb': nrm(keys[2], (2, H)),
        'emb_ln_g': jnp.ones((H,), jnp.float32),
        'emb_ln_b': jnp.zeros((H,), jnp.float32),
        'pooler_w': nrm(keys[3], (H, H)),
        'pooler_b': jnp.zeros((H,), jnp.float32),
        'layers': [],
    }
    for li in range(L):
        lk = jax.random.split(keys[4 + li], 6)
        params['layers'].append({
            'wq': nrm(lk[0], (H, H)), 'bq': jnp.zeros((H,), jnp.float32),
            'wk': nrm(lk[1], (H, H)), 'bk': jnp.zeros((H,), jnp.float32),
            'wv': nrm(lk[2], (H, H)), 'bv': jnp.zeros((H,), jnp.float32),
            'wo': nrm(lk[3], (H, H)), 'bo': jnp.zeros((H,), jnp.float32),
            'ln1_g': jnp.ones((H,), jnp.float32), 'ln1_b': jnp.zeros((H,), jnp.float32),
            'wi': nrm(lk[4], (H, I)), 'bi': jnp.zeros((I,), jnp.float32),
            'wo2': nrm(lk[5], (I, H)), 'bo2': jnp.zeros((H,), jnp.float32),
            'ln2_g': jnp.ones((H,), jnp.float32), 'ln2_b': jnp.zeros((H,), jnp.float32),
        })
    return params


def pack_params(params):
    """Pack the 38 per-op tensors into 4 slabs (done once, outside the hot path)."""
    def pad_vec(v):
        v = v.astype(jnp.float32)
        return jnp.pad(v, (0, _VW - v.shape[0]))

    row_w, wo2_w = [], []
    vec_rows = [pad_vec(params['emb_ln_g']), pad_vec(params['emb_ln_b'])]
    for lp in params['layers']:
        wqkv = jnp.concatenate([lp['wq'], lp['wk'], lp['wv']], axis=1)    # [H, 3H]
        row_w.append(jnp.concatenate([wqkv, lp['wo'], lp['wi']], axis=1))  # [H, 3H+H+I]
        wo2_w.append(lp['wo2'])                                            # [I, H]
        bqkv = jnp.concatenate([lp['bq'], lp['bk'], lp['bv']], axis=0)     # [3H]
        vec_rows += [pad_vec(bqkv), pad_vec(lp['bo']),
                     pad_vec(lp['ln1_g']), pad_vec(lp['ln1_b']),
                     pad_vec(lp['bi']), pad_vec(lp['bo2']),
                     pad_vec(lp['ln2_g']), pad_vec(lp['ln2_b'])]
    vec_rows.append(pad_vec(params['pooler_b']))
    assert len(vec_rows) == _NVEC

    return {
        'row_w': jnp.stack(row_w).astype(jnp.bfloat16),        # [L, H, 3H+H+I]
        'wo2_w': jnp.stack(wo2_w).astype(jnp.bfloat16),        # [L, I, H]
        'pooler_w': params['pooler_w'].astype(jnp.bfloat16),   # [H, H]
        'vecs': jnp.stack(vec_rows),                           # [NVEC, 96] f32
        'word_emb': params['word_emb'],
        'pos_emb': params['pos_emb'],
        'tok_emb': params['tok_emb'],
    }


# ----------------------------- forward pass -----------------------------
def bert_classifier_forward(packed, input_ids, attention_mask):
    """y_hat = tanh(BertModel(x, attention_mask).pooler_output) ; returns [B, H]."""
    Bsz, Sq = input_ids.shape
    assert (Bsz, Sq) == (B, S)

    # Embedding gathers stay as plain-JAX glue (data-dependent HBM gather).
    # TODO(synk): token_type_ids assumed all-zero (reference is called without them).
    emb = (packed['word_emb'][input_ids]
           + packed['pos_emb'][None, :Sq, :]
           + packed['tok_emb'][0][None, None, :]).reshape(Bsz * Sq, H)
    mask_flat = attention_mask.astype(jnp.float32).reshape(1, Bsz * Sq)
    mask_tiled = jnp.tile(mask_flat, (1, NH))                   # [1, NH*T] for fused heads

    args = (emb, mask_tiled, packed['row_w'], packed['wo2_w'],
            packed['pooler_w'], packed['vecs'])

    return pl.pallas_call(
        _bert_model_kernel,
        out_shape=jax.ShapeDtypeStruct((Bsz, H), jnp.float32),
        grid=(1,),
        in_specs=[_full_spec(a) for a in args],
        out_specs=pl.BlockSpec((Bsz, H), lambda i: (0, 0)),
        compiler_params=pltpu.CompilerParams(dimension_semantics=("arbitrary",)),
    )(*args)


# ----------------------------- main -----------------------------
if __name__ == "__main__":
    key = jax.random.PRNGKey(0)
    k_param, k_ids = jax.random.split(key)

    params = init_params(k_param)
    packed = pack_params(params)

    input_ids = jax.random.randint(k_ids, (B, S), 0, V, dtype=jnp.int32)
    attention_mask = jnp.array(
        [[1, 1, 1, 1, 1, 1, 1, 1],
         [1, 1, 1, 1, 1, 0, 0, 0]], dtype=jnp.int32)

    fwd = jax.jit(bert_classifier_forward)
    y = fwd(packed, input_ids, attention_mask)
    y = jax.block_until_ready(y)

    assert y.shape == (B, H) and y.dtype == jnp.float32
    assert bool(jnp.all(jnp.isfinite(y)))
    print("KERNEL_OK")
</pallas_src>

<mosaic_0001>
module attributes {stable_mosaic.version = 11 : i64} {
  func.func @_bert_model_kernel(%arg0: i32, %arg1: memref<16x32xf32, #tpu.memory_space<vmem>>, %arg2: memref<1x64xf32, #tpu.memory_space<vmem>>, %arg3: memref<2x32x192xbf16, #tpu.memory_space<vmem>>, %arg4: memref<2x64x32xbf16, #tpu.memory_space<vmem>>, %arg5: memref<32x32xbf16, #tpu.memory_space<vmem>>, %arg6: memref<19x96xf32, #tpu.memory_space<vmem>>, %arg7: memref<2x32xf32, #tpu.memory_space<vmem>>) attributes {dimension_semantics = [#tpu.dimension_semantics<arbitrary>], iteration_bounds = array<i64: 1>, scalar_prefetch = 0 : i64, scratch_operands = 0 : i64, tpu.core_type = #tpu.core_type<tc>, window_params = [{pipeline_mode = #tpu.pipeline_mode<synchronous>, transform_indices = @transform_0, window_bounds = array<i64: 16, 32>}, {pipeline_mode = #tpu.pipeline_mode<synchronous>, transform_indices = @transform_1, window_bounds = array<i64: 1, 64>}, {pipeline_mode = #tpu.pipeline_mode<synchronous>, transform_indices = @transform_2, window_bounds = array<i64: 2, 32, 192>}, {pipeline_mode = #tpu.pipeline_mode<synchronous>, transform_indices = @transform_3, window_bounds = array<i64: 2, 64, 32>}, {pipeline_mode = #tpu.pipeline_mode<synchronous>, transform_indices = @transform_4, window_bounds = array<i64: 32, 32>}, {pipeline_mode = #tpu.pipeline_mode<synchronous>, transform_indices = @transform_5, window_bounds = array<i64: 19, 96>}, {pipeline_mode = #tpu.pipeline_mode<synchronous>, transform_indices = @transform_6, window_bounds = array<i64: 2, 32>}]} {
    %0 = tpu.iota {dimensions = array<i32: 0>} : vector<64x64xi32>
    %c4_i32 = arith.constant 4 : i32
    %1 = vector.broadcast %c4_i32 : i32 to vector<64x64xi32>
    %2 = arith.shrsi %0, %1 : vector<64x64xi32>
    %3 = tpu.iota {dimensions = array<i32: 1>} : vector<64x64xi32>
    %c4_i32_0 = arith.constant 4 : i32
    %4 = vector.broadcast %c4_i32_0 : i32 to vector<64x64xi32>
    %5 = arith.shrsi %3, %4 : vector<64x64xi32>
    %6 = arith.cmpi eq, %2, %5 : vector<64x64xi32>
    %cst = arith.constant 1.000000e+00 : f32
    %cst_1 = arith.constant 0.000000e+00 : f32
    %7 = vector.broadcast %cst : f32 to vector<64x64xf32>
    %8 = vector.broadcast %cst_1 : f32 to vector<64x64xf32>
    %9 = arith.select %6, %7, %8 : vector<64x64xi1>, vector<64x64xf32>
    %10 = tpu.iota {dimensions = array<i32: 0>} : vector<64x32xi32>
    %c4_i32_2 = arith.constant 4 : i32
    %11 = vector.broadcast %c4_i32_2 : i32 to vector<64x32xi32>
    %12 = arith.shrsi %10, %11 : vector<64x32xi32>
    %13 = tpu.iota {dimensions = array<i32: 1>} : vector<64x32xi32>
    %c3_i32 = arith.constant 3 : i32
    %14 = vector.broadcast %c3_i32 : i32 to vector<64x32xi32>
    %15 = arith.shrsi %13, %14 : vector<64x32xi32>
    %16 = arith.cmpi eq, %12, %15 : vector<64x32xi32>
    %cst_3 = arith.constant 1.000000e+00 : f32
    %cst_4 = arith.constant 0.000000e+00 : f32
    %17 = vector.broadcast %cst_3 : f32 to vector<64x32xf32>
    %18 = vector.broadcast %cst_4 : f32 to vector<64x32xf32>
    %19 = arith.select %16, %17, %18 : vector<64x32xi1>, vector<64x32xf32>
    %20 = arith.truncf %19 : vector<64x32xf32> to vector<64x32xbf16>
    %c0 = arith.constant 0 : index
    %c0_5 = arith.constant 0 : index
    %21 = vector.load %arg2[%c0, %c0_5] : memref<1x64xf32, #tpu.memory_space<vmem>>, vector<1x64xf32>
    %22 = tpu.iota {dimensions = array<i32: 0>} : vector<16x64xi32>
    %c3_i32_6 = arith.constant 3 : i32
    %23 = vector.broadcast %c3_i32_6 : i32 to vector<16x64xi32>
    %24 = arith.shrsi %22, %23 : vector<16x64xi32>
    %25 = tpu.iota {dimensions = array<i32: 1>} : vector<16x64xi32>
    %c15_i32 = arith.constant 15 : i32
    %26 = vector.broadcast %c15_i32 : i32 to vector<16x64xi32>
    %27 = arith.andi %25, %26 : vector<16x64xi32>
    %c3_i32_7 = arith.constant 3 : i32
    %28 = vector.broadcast %c3_i32_7 : i32 to vector<16x64xi32>
    %29 = arith.shrsi %27, %28 : vector<16x64xi32>
    %30 = arith.cmpi eq, %24, %29 : vector<16x64xi32>
    %cst_8 = arith.constant 5.000000e-01 : f32
    %31 = vector.broadcast %cst_8 : f32 to vector<1x64xf32>
    %32 = arith.cmpf ogt, %21, %31 : vector<1x64xf32>
    %33 = vector.broadcast %32 : vector<1x64xi1> to vector<16x64xi1>
    %34 = arith.andi %30, %33 : vector<16x64xi1>
    %cst_9 = arith.constant 0.000000e+00 : f32
    %cst_10 = arith.constant -1.000000e+04 : f32
    %35 = vector.broadcast %cst_9 : f32 to vector<16x64xf32>
    %36 = vector.broadcast %cst_10 : f32 to vector<16x64xf32>
    %37 = arith.select %34, %35, %36 : vector<16x64xi1>, vector<16x64xf32>
    %c0_11 = arith.constant 0 : index
    %c0_12 = arith.constant 0 : index
    %38 = vector.load %arg1[%c0_11, %c0_12] : memref<16x32xf32, #tpu.memory_space<vmem>>, vector<16x32xf32>
    %c0_13 = arith.constant 0 : index
    %c0_14 = arith.constant 0 : index
    %39 = vector.load %arg6[%c0_13, %c0_14] : memref<19x96xf32, #tpu.memory_space<vmem>>, vector<1x32xf32>
    %c1 = arith.constant 1 : index
    %c0_15 = arith.constant 0 : index
    %40 = vector.load %arg6[%c1, %c0_15] : memref<19x96xf32, #tpu.memory_space<vmem>>, vector<1x32xf32>
    %cst_16 = arith.constant dense<0.000000e+00> : vector<16xf32>
    %41 = vector.multi_reduction <add>, %38, %cst_16 [1] : vector<16x32xf32> to vector<16xf32>
    %42 = vector.shape_cast %41 : vector<16xf32> to vector<16x1xf32>
    %cst_17 = arith.constant 3.200000e+01 : f32
    %43 = vector.broadcast %cst_17 : f32 to vector<16x1xf32>
    %44 = arith.divf %42, %43 : vector<16x1xf32>
    %45 = vector.broadcast %44 : vector<16x1xf32> to vector<16x32xf32>
    %46 = arith.subf %38, %45 : vector<16x32xf32>
    %47 = arith.mulf %46, %46 : vector<16x32xf32>
    %cst_18 = arith.constant dense<0.000000e+00> : vector<16xf32>
    %48 = vector.multi_reduction <add>, %47, %cst_18 [1] : vector<16x32xf32> to vector<16xf32>
    %49 = vector.shape_cast %48 : vector<16xf32> to vector<16x1xf32>
    %cst_19 = arith.constant 3.200000e+01 : f32
    %50 = vector.broadcast %cst_19 : f32 to vector<16x1xf32>
    %51 = arith.divf %49, %50 : vector<16x1xf32>
    %cst_20 = arith.constant 9.99999996E-13 : f32
    %52 = vector.broadcast %cst_20 : f32 to vector<16x1xf32>
    %53 = arith.addf %51, %52 : vector<16x1xf32>
    %54 = math.rsqrt %53 : vector<16x1xf32>
    %55 = vector.broadcast %54 : vector<16x1xf32> to vector<16x32xf32>
    %56 = arith.mulf %46, %55 : vector<16x32xf32>
    %57 = vector.broadcast %39 : vector<1x32xf32> to vector<16x32xf32>
    %58 = arith.mulf %56, %57 : vector<16x32xf32>
    %59 = vector.broadcast %40 : vector<1x32xf32> to vector<16x32xf32>
    %60 = arith.addf %58, %59 : vector<16x32xf32>
    %c0_21 = arith.constant 0 : index
    %c0_22 = arith.constant 0 : index
    %c0_23 = arith.constant 0 : index
    %61 = vector.load %arg3[%c0_21, %c0_22, %c0_23] : memref<2x32x192xbf16, #tpu.memory_space<vmem>>, vector<1x32x192xbf16>
    %62 = vector.shape_cast %61 : vector<1x32x192xbf16> to vector<32x192xbf16>
    %63 = vector.extract_strided_slice %62 {offsets = [0, 0], sizes = [32, 96], strides = [1, 1]} : vector<32x192xbf16> to vector<32x96xbf16>
    %64 = vector.extract_strided_slice %62 {offsets = [0, 96], sizes = [32, 32], strides = [1, 1]} : vector<32x192xbf16> to vector<32x32xbf16>
    %65 = vector.extract_strided_slice %62 {offsets = [0, 128], sizes = [32, 64], strides = [1, 1]} : vector<32x192xbf16> to vector<32x64xbf16>
    %c0_24 = arith.constant 0 : index
    %c0_25 = arith.constant 0 : index
    %c0_26 = arith.constant 0 : index
    %66 = vector.load %arg4[%c0_24, %c0_25, %c0_26] : memref<2x64x32xbf16, #tpu.memory_space<vmem>>, vector<1x64x32xbf16>
    %67 = vector.shape_cast %66 : vector<1x64x32xbf16> to vector<64x32xbf16>
    %c2 = arith.constant 2 : index
    %c0_27 = arith.constant 0 : index
    %68 = vector.load %arg6[%c2, %c0_27] : memref<19x96xf32, #tpu.memory_space<vmem>>, vector<1x96xf32>
    %c3 = arith.constant 3 : index
    %c0_28 = arith.constant 0 : index
    %69 = vector.load %arg6[%c3, %c0_28] : memref<19x96xf32, #tpu.memory_space<vmem>>, vector<1x32xf32>
    %c4 = arith.constant 4 : index
    %c0_29 = arith.constant 0 : index
    %70 = vector.load %arg6[%c4, %c0_29] : memref<19x96xf32, #tpu.memory_space<vmem>>, vector<1x32xf32>
    %c5 = arith.constant 5 : index
    %c0_30 = arith.constant 0 : index
    %71 = vector.load %arg6[%c5, %c0_30] : memref<19x96xf32, #tpu.memory_space<vmem>>, vector<1x32xf32>
    %c6 = arith.constant 6 : index
    %c0_31 = arith.constant 0 : index
    %72 = vector.load %arg6[%c6, %c0_31] : memref<19x96xf32, #tpu.memory_space<vmem>>, vector<1x64xf32>
    %c7 = arith.constant 7 : index
    %c0_32 = arith.constant 0 : index
    %73 = vector.load %arg6[%c7, %c0_32] : memref<19x96xf32, #tpu.memory_space<vmem>>, vector<1x32xf32>
    %c8 = arith.constant 8 : index
    %c0_33 = arith.constant 0 : index
    %74 = vector.load %arg6[%c8, %c0_33] : memref<19x96xf32, #tpu.memory_space<vmem>>, vector<1x32xf32>
    %c9 = arith.constant 9 : index
    %c0_34 = arith.constant 0 : index
    %75 = vector.load %arg6[%c9, %c0_34] : memref<19x96xf32, #tpu.memory_space<vmem>>, vector<1x32xf32>
    %76 = arith.truncf %60 : vector<16x32xf32> to vector<16x32xbf16>
    %cst_35 = arith.constant dense<0.000000e+00> : vector<16x96xf32>
    %77 = tpu.matmul %76, %63, %cst_35 {dimension_numbers = #tpu.dot_dimension_numbers<[1], [0], [0], [1], [0, 0, 1, 1], [], []>} : vector<16x32xbf16>, vector<32x96xbf16>, vector<16x96xf32> -> vector<16x96xf32>
    %78 = vector.broadcast %68 : vector<1x96xf32> to vector<16x96xf32>
    %79 = arith.addf %77, %78 : vector<16x96xf32>
    %80 = vector.extract_strided_slice %79 {offsets = [0, 0], sizes = [16, 32], strides = [1, 1]} : vector<16x96xf32> to vector<16x32xf32>
    %81 = vector.extract_strided_slice %79 {offsets = [0, 32], sizes = [16, 32], strides = [1, 1]} : vector<16x96xf32> to vector<16x32xf32>
    %82 = vector.extract_strided_slice %79 {offsets = [0, 64], sizes = [16, 32], strides = [1, 1]} : vector<16x96xf32> to vector<16x32xf32>
    %83 = tpu.concatenate %81, %81, %81, %81 in 0 : vector<16x32xf32>, vector<16x32xf32>, vector<16x32xf32>, vector<16x32xf32> -> vector<64x32xf32>
    %84 = arith.truncf %83 : vector<64x32xf32> to vector<64x32xbf16>
    %85 = arith.mulf %84, %20 : vector<64x32xbf16>
    %86 = tpu.concatenate %82, %82, %82, %82 in 0 : vector<16x32xf32>, vector<16x32xf32>, vector<16x32xf32>, vector<16x32xf32> -> vector<64x32xf32>
    %87 = arith.truncf %86 : vector<64x32xf32> to vector<64x32xbf16>
    %88 = arith.mulf %87, %20 : vector<64x32xbf16>
    %89 = arith.truncf %80 : vector<16x32xf32> to vector<16x32xbf16>
    %cst_36 = arith.constant dense<0.000000e+00> : vector<16x64xf32>
    %90 = tpu.matmul %89, %85, %cst_36 {dimension_numbers = #tpu.dot_dimension_numbers<[1], [1], [0], [0], [0, 0, 1, 0], [], []>} : vector<16x32xbf16>, vector<64x32xbf16>, vector<16x64xf32> -> vector<16x64xf32>
    %cst_37 = arith.constant 0.353553385 : f32
    %91 = vector.broadcast %cst_37 : f32 to vector<16x64xf32>
    %92 = arith.mulf %90, %91 : vector<16x64xf32>
    %93 = arith.addf %92, %37 : vector<16x64xf32>
    %cst_38 = arith.constant dense<0xFF800000> : vector<16xf32>
    %94 = vector.multi_reduction <maximumf>, %93, %cst_38 [1] : vector<16x64xf32> to vector<16xf32>
    %95 = vector.shape_cast %94 : vector<16xf32> to vector<16x1xf32>
    %96 = vector.broadcast %95 : vector<16x1xf32> to vector<16x64xf32>
    %97 = arith.subf %93, %96 : vector<16x64xf32>
    %98 = math.exp %97 : vector<16x64xf32>
    %cst_39 = arith.constant dense<0.000000e+00> : vector<16x64xf32>
    %99 = tpu.matmul %98, %9, %cst_39 {dimension_numbers = #tpu.dot_dimension_numbers<[1], [0], [0], [1], [0, 0, 1, 1], [], []>} : vector<16x64xf32>, vector<64x64xf32>, vector<16x64xf32> -> vector<16x64xf32>
    %100 = tpu.reciprocal %99 {approx = true} : vector<16x64xf32> -> vector<16x64xf32>
    %101 = arith.mulf %98, %100 : vector<16x64xf32>
    %102 = arith.truncf %101 : vector<16x64xf32> to vector<16x64xbf16>
    %cst_40 = arith.constant dense<0.000000e+00> : vector<16x32xf32>
    %103 = tpu.matmul %102, %88, %cst_40 {dimension_numbers = #tpu.dot_dimension_numbers<[1], [0], [0], [1], [0, 0, 1, 1], [], []>} : vector<16x64xbf16>, vector<64x32xbf16>, vector<16x32xf32> -> vector<16x32xf32>
    %104 = arith.truncf %103 : vector<16x32xf32> to vector<16x32xbf16>
    %cst_41 = arith.constant dense<0.000000e+00> : vector<16x32xf32>
    %105 = tpu.matmul %104, %64, %cst_41 {dimension_numbers = #tpu.dot_dimension_numbers<[1], [0], [0], [1], [0, 0, 1, 1], [], []>} : vector<16x32xbf16>, vector<32x32xbf16>, vector<16x32xf32> -> vector<16x32xf32>
    %106 = vector.broadcast %69 : vector<1x32xf32> to vector<16x32xf32>
    %107 = arith.addf %105, %106 : vector<16x32xf32>
    %108 = arith.addf %107, %60 : vector<16x32xf32>
    %cst_42 = arith.constant dense<0.000000e+00> : vector<16xf32>
    %109 = vector.multi_reduction <add>, %108, %cst_42 [1] : vector<16x32xf32> to vector<16xf32>
    %110 = vector.shape_cast %109 : vector<16xf32> to vector<16x1xf32>
    %cst_43 = arith.constant 3.200000e+01 : f32
    %111 = vector.broadcast %cst_43 : f32 to vector<16x1xf32>
    %112 = arith.divf %110, %111 : vector<16x1xf32>
    %113 = vector.broadcast %112 : vector<16x1xf32> to vector<16x32xf32>
    %114 = arith.subf %108, %113 : vector<16x32xf32>
    %115 = arith.mulf %114, %114 : vector<16x32xf32>
    %cst_44 = arith.constant dense<0.000000e+00> : vector<16xf32>
    %116 = vector.multi_reduction <add>, %115, %cst_44 [1] : vector<16x32xf32> to vector<16xf32>
    %117 = vector.shape_cast %116 : vector<16xf32> to vector<16x1xf32>
    %cst_45 = arith.constant 3.200000e+01 : f32
    %118 = vector.broadcast %cst_45 : f32 to vector<16x1xf32>
    %119 = arith.divf %117, %118 : vector<16x1xf32>
    %cst_46 = arith.constant 9.99999996E-13 : f32
    %120 = vector.broadcast %cst_46 : f32 to vector<16x1xf32>
    %121 = arith.addf %119, %120 : vector<16x1xf32>
    %122 = math.rsqrt %121 : vector<16x1xf32>
    %123 = vector.broadcast %122 : vector<16x1xf32> to vector<16x32xf32>
    %124 = arith.mulf %114, %123 : vector<16x32xf32>
    %125 = vector.broadcast %70 : vector<1x32xf32> to vector<16x32xf32>
    %126 = arith.mulf %124, %125 : vector<16x32xf32>
    %127 = vector.broadcast %71 : vector<1x32xf32> to vector<16x32xf32>
    %128 = arith.addf %126, %127 : vector<16x32xf32>
    %129 = arith.truncf %128 : vector<16x32xf32> to vector<16x32xbf16>
    %cst_47 = arith.constant dense<0.000000e+00> : vector<16x64xf32>
    %130 = tpu.matmul %129, %65, %cst_47 {dimension_numbers = #tpu.dot_dimension_numbers<[1], [0], [0], [1], [0, 0, 1, 1], [], []>} : vector<16x32xbf16>, vector<32x64xbf16>, vector<16x64xf32> -> vector<16x64xf32>
    %131 = vector.broadcast %72 : vector<1x64xf32> to vector<16x64xf32>
    %132 = arith.addf %130, %131 : vector<16x64xf32>
    %cst_48 = arith.constant 5.000000e-01 : f32
    %133 = vector.broadcast %cst_48 : f32 to vector<16x64xf32>
    %134 = arith.mulf %133, %132 : vector<16x64xf32>
    %cst_49 = arith.constant 4.471500e-02 : f32
    %135 = vector.broadcast %cst_49 : f32 to vector<16x64xf32>
    %136 = arith.mulf %135, %132 : vector<16x64xf32>
    %137 = arith.mulf %136, %132 : vector<16x64xf32>
    %138 = arith.mulf %137, %132 : vector<16x64xf32>
    %139 = arith.addf %132, %138 : vector<16x64xf32>
    %cst_50 = arith.constant 0.797884583 : f32
    %140 = vector.broadcast %cst_50 : f32 to vector<16x64xf32>
    %141 = arith.mulf %140, %139 : vector<16x64xf32>
    %142 = math.tanh %141 : vector<16x64xf32>
    %cst_51 = arith.constant 1.000000e+00 : f32
    %143 = vector.broadcast %cst_51 : f32 to vector<16x64xf32>
    %144 = arith.addf %143, %142 : vector<16x64xf32>
    %145 = arith.mulf %134, %144 : vector<16x64xf32>
    %146 = arith.truncf %145 : vector<16x64xf32> to vector<16x64xbf16>
    %cst_52 = arith.constant dense<0.000000e+00> : vector<16x32xf32>
    %147 = tpu.matmul %146, %67, %cst_52 {dimension_numbers = #tpu.dot_dimension_numbers<[1], [0], [0], [1], [0, 0, 1, 1], [], []>} : vector<16x64xbf16>, vector<64x32xbf16>, vector<16x32xf32> -> vector<16x32xf32>
    %148 = vector.broadcast %73 : vector<1x32xf32> to vector<16x32xf32>
    %149 = arith.addf %147, %148 : vector<16x32xf32>
    %150 = arith.addf %149, %128 : vector<16x32xf32>
    %cst_53 = arith.constant dense<0.000000e+00> : vector<16xf32>
    %151 = vector.multi_reduction <add>, %150, %cst_53 [1] : vector<16x32xf32> to vector<16xf32>
    %152 = vector.shape_cast %151 : vector<16xf32> to vector<16x1xf32>
    %cst_54 = arith.constant 3.200000e+01 : f32
    %153 = vector.broadcast %cst_54 : f32 to vector<16x1xf32>
    %154 = arith.divf %152, %153 : vector<16x1xf32>
    %155 = vector.broadcast %154 : vector<16x1xf32> to vector<16x32xf32>
    %156 = arith.subf %150, %155 : vector<16x32xf32>
    %157 = arith.mulf %156, %156 : vector<16x32xf32>
    %cst_55 = arith.constant dense<0.000000e+00> : vector<16xf32>
    %158 = vector.multi_reduction <add>, %157, %cst_55 [1] : vector<16x32xf32> to vector<16xf32>
    %159 = vector.shape_cast %158 : vector<16xf32> to vector<16x1xf32>
    %cst_56 = arith.constant 3.200000e+01 : f32
    %160 = vector.broadcast %cst_56 : f32 to vector<16x1xf32>
    %161 = arith.divf %159, %160 : vector<16x1xf32>
    %cst_57 = arith.constant 9.99999996E-13 : f32
    %162 = vector.broadcast %cst_57 : f32 to vector<16x1xf32>
    %163 = arith.addf %161, %162 : vector<16x1xf32>
    %164 = math.rsqrt %163 : vector<16x1xf32>
    %165 = vector.broadcast %164 : vector<16x1xf32> to vector<16x32xf32>
    %166 = arith.mulf %156, %165 : vector<16x32xf32>
    %167 = vector.broadcast %74 : vector<1x32xf32> to vector<16x32xf32>
    %168 = arith.mulf %166, %167 : vector<16x32xf32>
    %169 = vector.broadcast %75 : vector<1x32xf32> to vector<16x32xf32>
    %170 = arith.addf %168, %169 : vector<16x32xf32>
    %c1_58 = arith.constant 1 : index
    %c0_59 = arith.constant 0 : index
    %c0_60 = arith.constant 0 : index
    %171 = vector.load %arg3[%c1_58, %c0_59, %c0_60] : memref<2x32x192xbf16, #tpu.memory_space<vmem>>, vector<1x32x192xbf16>
    %172 = vector.shape_cast %171 : vector<1x32x192xbf16> to vector<32x192xbf16>
    %173 = vector.extract_strided_slice %172 {offsets = [0, 0], sizes = [32, 96], strides = [1, 1]} : vector<32x192xbf16> to vector<32x96xbf16>
    %174 = vector.extract_strided_slice %172 {offsets = [0, 96], sizes = [32, 32], strides = [1, 1]} : vector<32x192xbf16> to vector<32x32xbf16>
    %175 = vector.extract_strided_slice %172 {offsets = [0, 128], sizes = [32, 64], strides = [1, 1]} : vector<32x192xbf16> to vector<32x64xbf16>
    %c1_61 = arith.constant 1 : index
    %c0_62 = arith.constant 0 : index
    %c0_63 = arith.constant 0 : index
    %176 = vector.load %arg4[%c1_61, %c0_62, %c0_63] : memref<2x64x32xbf16, #tpu.memory_space<vmem>>, vector<1x64x32xbf16>
    %177 = vector.shape_cast %176 : vector<1x64x32xbf16> to vector<64x32xbf16>
    %c10 = arith.constant 10 : index
    %c0_64 = arith.constant 0 : index
    %178 = vector.load %arg6[%c10, %c0_64] : memref<19x96xf32, #tpu.memory_space<vmem>>, vector<1x96xf32>
    %c11 = arith.constant 11 : index
    %c0_65 = arith.constant 0 : index
    %179 = vector.load %arg6[%c11, %c0_65] : memref<19x96xf32, #tpu.memory_space<vmem>>, vector<1x32xf32>
    %c12 = arith.constant 12 : index
    %c0_66 = arith.constant 0 : index
    %180 = vector.load %arg6[%c12, %c0_66] : memref<19x96xf32, #tpu.memory_space<vmem>>, vector<1x32xf32>
    %c13 = arith.constant 13 : index
    %c0_67 = arith.constant 0 : index
    %181 = vector.load %arg6[%c13, %c0_67] : memref<19x96xf32, #tpu.memory_space<vmem>>, vector<1x32xf32>
    %c14 = arith.constant 14 : index
    %c0_68 = arith.constant 0 : index
    %182 = vector.load %arg6[%c14, %c0_68] : memref<19x96xf32, #tpu.memory_space<vmem>>, vector<1x64xf32>
    %c15 = arith.constant 15 : index
    %c0_69 = arith.constant 0 : index
    %183 = vector.load %arg6[%c15, %c0_69] : memref<19x96xf32, #tpu.memory_space<vmem>>, vector<1x32xf32>
    %c16 = arith.constant 16 : index
    %c0_70 = arith.constant 0 : index
    %184 = vector.load %arg6[%c16, %c0_70] : memref<19x96xf32, #tpu.memory_space<vmem>>, vector<1x32xf32>
    %c17 = arith.constant 17 : index
    %c0_71 = arith.constant 0 : index
    %185 = vector.load %arg6[%c17, %c0_71] : memref<19x96xf32, #tpu.memory_space<vmem>>, vector<1x32xf32>
    %186 = arith.truncf %170 : vector<16x32xf32> to vector<16x32xbf16>
    %cst_72 = arith.constant dense<0.000000e+00> : vector<16x96xf32>
    %187 = tpu.matmul %186, %173, %cst_72 {dimension_numbers = #tpu.dot_dimension_numbers<[1], [0], [0], [1], [0, 0, 1, 1], [], []>} : vector<16x32xbf16>, vector<32x96xbf16>, vector<16x96xf32> -> vector<16x96xf32>
    %188 = vector.broadcast %178 : vector<1x96xf32> to vector<16x96xf32>
    %189 = arith.addf %187, %188 : vector<16x96xf32>
    %190 = vector.extract_strided_slice %189 {offsets = [0, 0], sizes = [16, 32], strides = [1, 1]} : vector<16x96xf32> to vector<16x32xf32>
    %191 = vector.extract_strided_slice %189 {offsets = [0, 32], sizes = [16, 32], strides = [1, 1]} : vector<16x96xf32> to vector<16x32xf32>
    %192 = vector.extract_strided_slice %189 {offsets = [0, 64], sizes = [16, 32], strides = [1, 1]} : vector<16x96xf32> to vector<16x32xf32>
    %193 = tpu.concatenate %191, %191, %191, %191 in 0 : vector<16x32xf32>, vector<16x32xf32>, vector<16x32xf32>, vector<16x32xf32> -> vector<64x32xf32>
    %194 = arith.truncf %193 : vector<64x32xf32> to vector<64x32xbf16>
    %195 = arith.mulf %194, %20 : vector<64x32xbf16>
    %196 = tpu.concatenate %192, %192, %192, %192 in 0 : vector<16x32xf32>, vector<16x32xf32>, vector<16x32xf32>, vector<16x32xf32> -> vector<64x32xf32>
    %197 = arith.truncf %196 : vector<64x32xf32> to vector<64x32xbf16>
    %198 = arith.mulf %197, %20 : vector<64x32xbf16>
    %199 = arith.truncf %190 : vector<16x32xf32> to vector<16x32xbf16>
    %cst_73 = arith.constant dense<0.000000e+00> : vector<16x64xf32>
    %200 = tpu.matmul %199, %195, %cst_73 {dimension_numbers = #tpu.dot_dimension_numbers<[1], [1], [0], [0], [0, 0, 1, 0], [], []>} : vector<16x32xbf16>, vector<64x32xbf16>, vector<16x64xf32> -> vector<16x64xf32>
    %cst_74 = arith.constant 0.353553385 : f32
    %201 = vector.broadcast %cst_74 : f32 to vector<16x64xf32>
    %202 = arith.mulf %200, %201 : vector<16x64xf32>
    %203 = arith.addf %202, %37 : vector<16x64xf32>
    %cst_75 = arith.constant dense<0xFF800000> : vector<16xf32>
    %204 = vector.multi_reduction <maximumf>, %203, %cst_75 [1] : vector<16x64xf32> to vector<16xf32>
    %205 = vector.shape_cast %204 : vector<16xf32> to vector<16x1xf32>
    %206 = vector.broadcast %205 : vector<16x1xf32> to vector<16x64xf32>
    %207 = arith.subf %203, %206 : vector<16x64xf32>
    %208 = math.exp %207 : vector<16x64xf32>
    %cst_76 = arith.constant dense<0.000000e+00> : vector<16x64xf32>
    %209 = tpu.matmul %208, %9, %cst_76 {dimension_numbers = #tpu.dot_dimension_numbers<[1], [0], [0], [1], [0, 0, 1, 1], [], []>} : vector<16x64xf32>, vector<64x64xf32>, vector<16x64xf32> -> vector<16x64xf32>
    %210 = tpu.reciprocal %209 {approx = true} : vector<16x64xf32> -> vector<16x64xf32>
    %211 = arith.mulf %208, %210 : vector<16x64xf32>
    %212 = arith.truncf %211 : vector<16x64xf32> to vector<16x64xbf16>
    %cst_77 = arith.constant dense<0.000000e+00> : vector<16x32xf32>
    %213 = tpu.matmul %212, %198, %cst_77 {dimension_numbers = #tpu.dot_dimension_numbers<[1], [0], [0], [1], [0, 0, 1, 1], [], []>} : vector<16x64xbf16>, vector<64x32xbf16>, vector<16x32xf32> -> vector<16x32xf32>
    %214 = arith.truncf %213 : vector<16x32xf32> to vector<16x32xbf16>
    %cst_78 = arith.constant dense<0.000000e+00> : vector<16x32xf32>
    %215 = tpu.matmul %214, %174, %cst_78 {dimension_numbers = #tpu.dot_dimension_numbers<[1], [0], [0], [1], [0, 0, 1, 1], [], []>} : vector<16x32xbf16>, vector<32x32xbf16>, vector<16x32xf32> -> vector<16x32xf32>
    %216 = vector.broadcast %179 : vector<1x32xf32> to vector<16x32xf32>
    %217 = arith.addf %215, %216 : vector<16x32xf32>
    %218 = arith.addf %217, %170 : vector<16x32xf32>
    %cst_79 = arith.constant dense<0.000000e+00> : vector<16xf32>
    %219 = vector.multi_reduction <add>, %218, %cst_79 [1] : vector<16x32xf32> to vector<16xf32>
    %220 = vector.shape_cast %219 : vector<16xf32> to vector<16x1xf32>
    %cst_80 = arith.constant 3.200000e+01 : f32
    %221 = vector.broadcast %cst_80 : f32 to vector<16x1xf32>
    %222 = arith.divf %220, %221 : vector<16x1xf32>
    %223 = vector.broadcast %222 : vector<16x1xf32> to vector<16x32xf32>
    %224 = arith.subf %218, %223 : vector<16x32xf32>
    %225 = arith.mulf %224, %224 : vector<16x32xf32>
    %cst_81 = arith.constant dense<0.000000e+00> : vector<16xf32>
    %226 = vector.multi_reduction <add>, %225, %cst_81 [1] : vector<16x32xf32> to vector<16xf32>
    %227 = vector.shape_cast %226 : vector<16xf32> to vector<16x1xf32>
    %cst_82 = arith.constant 3.200000e+01 : f32
    %228 = vector.broadcast %cst_82 : f32 to vector<16x1xf32>
    %229 = arith.divf %227, %228 : vector<16x1xf32>
    %cst_83 = arith.constant 9.99999996E-13 : f32
    %230 = vector.broadcast %cst_83 : f32 to vector<16x1xf32>
    %231 = arith.addf %229, %230 : vector<16x1xf32>
    %232 = math.rsqrt %231 : vector<16x1xf32>
    %233 = vector.broadcast %232 : vector<16x1xf32> to vector<16x32xf32>
    %234 = arith.mulf %224, %233 : vector<16x32xf32>
    %235 = vector.broadcast %180 : vector<1x32xf32> to vector<16x32xf32>
    %236 = arith.mulf %234, %235 : vector<16x32xf32>
    %237 = vector.broadcast %181 : vector<1x32xf32> to vector<16x32xf32>
    %238 = arith.addf %236, %237 : vector<16x32xf32>
    %239 = arith.truncf %238 : vector<16x32xf32> to vector<16x32xbf16>
    %cst_84 = arith.constant dense<0.000000e+00> : vector<16x64xf32>
    %240 = tpu.matmul %239, %175, %cst_84 {dimension_numbers = #tpu.dot_dimension_numbers<[1], [0], [0], [1], [0, 0, 1, 1], [], []>} : vector<16x32xbf16>, vector<32x64xbf16>, vector<16x64xf32> -> vector<16x64xf32>
    %241 = vector.broadcast %182 : vector<1x64xf32> to vector<16x64xf32>
    %242 = arith.addf %240, %241 : vector<16x64xf32>
    %cst_85 = arith.constant 5.000000e-01 : f32
    %243 = vector.broadcast %cst_85 : f32 to vector<16x64xf32>
    %244 = arith.mulf %243, %242 : vector<16x64xf32>
    %cst_86 = arith.constant 4.471500e-02 : f32
    %245 = vector.broadcast %cst_86 : f32 to vector<16x64xf32>
    %246 = arith.mulf %245, %242 : vector<16x64xf32>
    %247 = arith.mulf %246, %242 : vector<16x64xf32>
    %248 = arith.mulf %247, %242 : vector<16x64xf32>
    %249 = arith.addf %242, %248 : vector<16x64xf32>
    %cst_87 = arith.constant 0.797884583 : f32
    %250 = vector.broadcast %cst_87 : f32 to vector<16x64xf32>
    %251 = arith.mulf %250, %249 : vector<16x64xf32>
    %252 = math.tanh %251 : vector<16x64xf32>
    %cst_88 = arith.constant 1.000000e+00 : f32
    %253 = vector.broadcast %cst_88 : f32 to vector<16x64xf32>
    %254 = arith.addf %253, %252 : vector<16x64xf32>
    %255 = arith.mulf %244, %254 : vector<16x64xf32>
    %256 = arith.truncf %255 : vector<16x64xf32> to vector<16x64xbf16>
    %cst_89 = arith.constant dense<0.000000e+00> : vector<16x32xf32>
    %257 = tpu.matmul %256, %177, %cst_89 {dimension_numbers = #tpu.dot_dimension_numbers<[1], [0], [0], [1], [0, 0, 1, 1], [], []>} : vector<16x64xbf16>, vector<64x32xbf16>, vector<16x32xf32> -> vector<16x32xf32>
    %258 = vector.broadcast %183 : vector<1x32xf32> to vector<16x32xf32>
    %259 = arith.addf %257, %258 : vector<16x32xf32>
    %260 = arith.addf %259, %238 : vector<16x32xf32>
    %cst_90 = arith.constant dense<0.000000e+00> : vector<16xf32>
    %261 = vector.multi_reduction <add>, %260, %cst_90 [1] : vector<16x32xf32> to vector<16xf32>
    %262 = vector.shape_cast %261 : vector<16xf32> to vector<16x1xf32>
    %cst_91 = arith.constant 3.200000e+01 : f32
    %263 = vector.broadcast %cst_91 : f32 to vector<16x1xf32>
    %264 = arith.divf %262, %263 : vector<16x1xf32>
    %265 = vector.broadcast %264 : vector<16x1xf32> to vector<16x32xf32>
    %266 = arith.subf %260, %265 : vector<16x32xf32>
    %267 = arith.mulf %266, %266 : vector<16x32xf32>
    %cst_92 = arith.constant dense<0.000000e+00> : vector<16xf32>
    %268 = vector.multi_reduction <add>, %267, %cst_92 [1] : vector<16x32xf32> to vector<16xf32>
    %269 = vector.shape_cast %268 : vector<16xf32> to vector<16x1xf32>
    %cst_93 = arith.constant 3.200000e+01 : f32
    %270 = vector.broadcast %cst_93 : f32 to vector<16x1xf32>
    %271 = arith.divf %269, %270 : vector<16x1xf32>
    %cst_94 = arith.constant 9.99999996E-13 : f32
    %272 = vector.broadcast %cst_94 : f32 to vector<16x1xf32>
    %273 = arith.addf %271, %272 : vector<16x1xf32>
    %274 = math.rsqrt %273 : vector<16x1xf32>
    %275 = vector.broadcast %274 : vector<16x1xf32> to vector<16x32xf32>
    %276 = arith.mulf %266, %275 : vector<16x32xf32>
    %277 = vector.broadcast %184 : vector<1x32xf32> to vector<16x32xf32>
    %278 = arith.mulf %276, %277 : vector<16x32xf32>
    %279 = vector.broadcast %185 : vector<1x32xf32> to vector<16x32xf32>
    %280 = arith.addf %278, %279 : vector<16x32xf32>
    %281 = tpu.iota {dimensions = array<i32: 0>} : vector<2x16xi32>
    %282 = tpu.iota {dimensions = array<i32: 1>} : vector<2x16xi32>
    %c8_i32 = arith.constant 8 : i32
    %283 = vector.broadcast %c8_i32 : i32 to vector<2x16xi32>
    %284 = arith.muli %281, %283 : vector<2x16xi32>
    %285 = arith.cmpi eq, %282, %284 : vector<2x16xi32>
    %cst_95 = arith.constant 1.000000e+00 : f32
    %cst_96 = arith.constant 0.000000e+00 : f32
    %286 = vector.broadcast %cst_95 : f32 to vector<2x16xf32>
    %287 = vector.broadcast %cst_96 : f32 to vector<2x16xf32>
    %288 = arith.select %285, %286, %287 : vector<2x16xi1>, vector<2x16xf32>
    %cst_97 = arith.constant dense<0.000000e+00> : vector<2x32xf32>
    %289 = tpu.matmul %288, %280, %cst_97 {dimension_numbers = #tpu.dot_dimension_numbers<[1], [0], [0], [1], [0, 0, 1, 1], [], []>} : vector<2x16xf32>, vector<16x32xf32>, vector<2x32xf32> -> vector<2x32xf32>
    %290 = arith.truncf %289 : vector<2x32xf32> to vector<2x32xbf16>
    %c0_98 = arith.constant 0 : index
    %c0_99 = arith.constant 0 : index
    %291 = vector.load %arg5[%c0_98, %c0_99] : memref<32x32xbf16, #tpu.memory_space<vmem>>, vector<32x32xbf16>
    %cst_100 = arith.constant dense<0.000000e+00> : vector<2x32xf32>
    %292 = tpu.matmul %290, %291, %cst_100 {dimension_numbers = #tpu.dot_dimension_numbers<[1], [0], [0], [1], [0, 0, 1, 1], [], []>} : vector<2x32xbf16>, vector<32x32xbf16>, vector<2x32xf32> -> vector<2x32xf32>
    %c18 = arith.constant 18 : index
    %c0_101 = arith.constant 0 : index
    %293 = vector.load %arg6[%c18, %c0_101] : memref<19x96xf32, #tpu.memory_space<vmem>>, vector<1x32xf32>
    %294 = vector.broadcast %293 : vector<1x32xf32> to vector<2x32xf32>
    %295 = arith.addf %292, %294 : vector<2x32xf32>
    %296 = math.tanh %295 : vector<2x32xf32>
    %297 = math.tanh %296 : vector<2x32xf32>
    %c0_102 = arith.constant 0 : index
    %c0_103 = arith.constant 0 : index
    %298 = vector.load %arg7[%c0_102, %c0_103] : memref<2x32xf32, #tpu.memory_space<vmem>>, vector<2x32xf32>
    tpu.vector_store %arg7[%c0_102, %c0_103], %297 {strides = array<i32>} : memref<2x32xf32, #tpu.memory_space<vmem>>, vector<2x32xf32>,
    return
  }
  func.func @transform_0(%arg0: i32) -> (i32, i32) {
    %c0_i32 = arith.constant 0 : i32
    %c0_i32_0 = arith.constant 0 : i32
    %c0_i32_1 = arith.constant 0 : i32
    return %c0_i32, %c0_i32_0 : i32, i32
  }
  func.func @transform_1(%arg0: i32) -> (i32, i32) {
    %c0_i32 = arith.constant 0 : i32
    %c0_i32_0 = arith.constant 0 : i32
    %c0_i32_1 = arith.constant 0 : i32
    return %c0_i32, %c0_i32_0 : i32, i32
  }
  func.func @transform_2(%arg0: i32) -> (i32, i32, i32) {
    %c0_i32 = arith.constant 0 : i32
    %c0_i32_0 = arith.constant 0 : i32
    %c0_i32_1 = arith.constant 0 : i32
    %c0_i32_2 = arith.constant 0 : i32
    return %c0_i32, %c0_i32_0, %c0_i32_1 : i32, i32, i32
  }
  func.func @transform_3(%arg0: i32) -> (i32, i32, i32) {
    %c0_i32 = arith.constant 0 : i32
    %c0_i32_0 = arith.constant 0 : i32
    %c0_i32_1 = arith.constant 0 : i32
    %c0_i32_2 = arith.constant 0 : i32
    return %c0_i32, %c0_i32_0, %c0_i32_1 : i32, i32, i32
  }
  func.func @transform_4(%arg0: i32) -> (i32, i32) {
    %c0_i32 = arith.constant 0 : i32
    %c0_i32_0 = arith.constant 0 : i32
    %c0_i32_1 = arith.constant 0 : i32
    return %c0_i32, %c0_i32_0 : i32, i32
  }
  func.func @transform_5(%arg0: i32) -> (i32, i32) {
    %c0_i32 = arith.constant 0 : i32
    %c0_i32_0 = arith.constant 0 : i32
    %c0_i32_1 = arith.constant 0 : i32
    return %c0_i32, %c0_i32_0 : i32, i32
  }
  func.func @transform_6(%arg0: i32) -> (i32, i32) {
    %c0_i32 = arith.constant 0 : i32
    %c0_i32_0 = arith.constant 0 : i32
    %c0_i32_1 = arith.constant 0 : i32
    return %c0_i32, %c0_i32_0 : i32, i32
  }
}

</mosaic_0001>

<llo_original>
// kernel: bert_classifier_forward.1
$region0: #{bert_classifier_forward.1}
  #allocation0 [shape = 'u32[]', space=smem, size = 0x4, offset = 0x4, fixed_abs, tag = 'smem constant byte address 0x4 - core index']
  #allocation1 [shape = 'u32[72,128]{1,0:T(1,128)}', space=vmem, size = 0x9000, scoped, tag = 'internal scratch']
  %s0 = inlined_call_operand.vmem [shape: f32[16,32], index: 0, kind: input, shape index: {}]
  %s1 = inlined_call_operand.vmem [shape: f32[1,64], index: 1, kind: input, shape index: {}]
  %s2 = inlined_call_operand.vmem [shape: bf16[2,32,192], index: 2, kind: input, shape index: {}]
  %s3 = inlined_call_operand.vmem [shape: bf16[2,64,32], index: 3, kind: input, shape index: {}]
  %s4 = inlined_call_operand.vmem [shape: bf16[32,32], index: 4, kind: input, shape index: {}]
  %s5 = inlined_call_operand.vmem [shape: f32[19,96], index: 5, kind: input, shape index: {}]
  %s6 = inlined_call_operand.hbm [shape: f32[2,32], index: 6, kind: output, shape index: {}]
  %s7 = sld [smem:[#allocation0]]
  $region34: #{bert_classifier_forward.1} parent=0
    _
  %s9 = ssub.s32 1, %s7
  %s10 = scalar_select 0, %s9, %s7
  $region1: #{bert_classifier_forward.1} parent=0
    #allocation2 [shape = 'u8[1024]{0}', space=vmem, size = 0x400, scoped, tag = 'output window, operand 0, single buffered']
    #allocation3 [shape = 's32[1]{0}', space=sflag, size = 0x4, scoped, tag = 'scoped memory for bert_classifier_forward.1']
    %11 = vsyncpa [#allocation3], 0
    // Predicated region
    $region2: #{bert_classifier_forward.1} parent=1 // pred_check
      _
    $region3: #{bert_classifier_forward.1} parent=1 // pred_check_branch
      %13 = sbr.rel (0) target = $region5
    $region4: #{bert_classifier_forward.1} parent=1 // pred_region
      _
    $region5: #{bert_classifier_forward.1} parent=1 // pred_fallthru
      _
    // Predicated region
    $region6: #{bert_classifier_forward.1} parent=1 // pred_check
      _
    $region7: #{bert_classifier_forward.1} parent=1 // pred_check_branch
      %15 = sbr.rel (0) target = $region9
    $region8: #{bert_classifier_forward.1} parent=1 // pred_region
      _
    $region9: #{bert_classifier_forward.1} parent=1 // pred_fallthru
      _
    // Predicated region
    $region10: #{bert_classifier_forward.1} parent=1 // pred_check
      _
    $region11: #{bert_classifier_forward.1} parent=1 // pred_check_branch
      %17 = sbr.rel (0) target = $region13
    $region12: #{bert_classifier_forward.1} parent=1 // pred_region
      _
    $region13: #{bert_classifier_forward.1} parent=1 // pred_fallthru
      _
    // Predicated region
    $region14: #{bert_classifier_forward.1} parent=1 // pred_check
      _
    $region15: #{bert_classifier_forward.1} parent=1 // pred_check_branch
      %19 = sbr.rel (0) target = $region17
    $region16: #{bert_classifier_forward.1} parent=1 // pred_region
      _
    $region17: #{bert_classifier_forward.1} parent=1 // pred_fallthru
      _
    // Predicated region
    $region18: #{bert_classifier_forward.1} parent=1 // pred_check
      _
    $region19: #{bert_classifier_forward.1} parent=1 // pred_check_branch
      %21 = sbr.rel (0) target = $region21
    $region20: #{bert_classifier_forward.1} parent=1 // pred_region
      _
    $region21: #{bert_classifier_forward.1} parent=1 // pred_fallthru
      _
    // Predicated region
    $region22: #{bert_classifier_forward.1} parent=1 // pred_check
      _
    $region23: #{bert_classifier_forward.1} parent=1 // pred_check_branch
      %23 = sbr.rel (0) target = $region25
    $region24: #{bert_classifier_forward.1} parent=1 // pred_region
      _
    $region25: #{bert_classifier_forward.1} parent=1 // pred_fallthru
      _
    %v25 = vlaneseq
    %v26 = vshrl.u32 %v25, 7
    %v27 = vadd.s32 %v26, 8
    %v28 = vadd.s32 %v26, 16
    %v29 = vadd.s32 %v26, 24
    %v30 = vadd.s32 %v26, 32
    %v31 = vadd.s32 %v26, 40
    %v32 = vadd.s32 %v26, 48
    %v33 = vadd.s32 %v26, 56
    %v34 = vshra.s32 %v26, 4
    %v35 = vshra.s32 %v27, 4
    %v36 = vshra.s32 %v28, 4
    %v37 = vshra.s32 %v29, 4
    %v38 = vshra.s32 %v30, 4
    %v39 = vshra.s32 %v31, 4
    %v40 = vshra.s32 %v32, 4
    %v41 = vshra.s32 %v33, 4
    %v42 = vlaneseq
    %v43 = vand.u32 %v42, 127
    %v44 = vshra.s32 %v43, 4
    %vm45 = vcmp.eq.s32.totalorder %v34, %v44
    %vm46 = vcmp.eq.s32.totalorder %v35, %v44
    %vm47 = vcmp.eq.s32.totalorder %v36, %v44
    %vm48 = vcmp.eq.s32.totalorder %v37, %v44
    %vm49 = vcmp.eq.s32.totalorder %v38, %v44
    %vm50 = vcmp.eq.s32.totalorder %v39, %v44
    %vm51 = vcmp.eq.s32.totalorder %v40, %v44
    %vm52 = vcmp.eq.s32.totalorder %v41, %v44
    %v53 = vsel %vm45, 1.0, 0.0
    %v54 = vsel %vm46, 1.0, 0.0
    %v55 = vsel %vm47, 1.0, 0.0
    %v56 = vsel %vm48, 1.0, 0.0
    %v57 = vsel %vm49, 1.0, 0.0
    %v58 = vsel %vm50, 1.0, 0.0
    %v59 = vsel %vm51, 1.0, 0.0
    %v60 = vsel %vm52, 1.0, 0.0
    %v61 = vshra.s32 %v43, 3
    %vm62 = vcmp.eq.s32.totalorder %v34, %v61
    %vm63 = vcmp.eq.s32.totalorder %v35, %v61
    %vm64 = vcmp.eq.s32.totalorder %v36, %v61
    %vm65 = vcmp.eq.s32.totalorder %v37, %v61
    %vm66 = vcmp.eq.s32.totalorder %v38, %v61
    %vm67 = vcmp.eq.s32.totalorder %v39, %v61
    %vm68 = vcmp.eq.s32.totalorder %v40, %v61
    %vm69 = vcmp.eq.s32.totalorder %v41, %v61
    %v70 = vsel %vm62, 1.0, 0.0
    %v71 = vsel %vm63, 1.0, 0.0
    %v72 = vsel %vm64, 1.0, 0.0
    %v73 = vsel %vm65, 1.0, 0.0
    %v74 = vsel %vm66, 1.0, 0.0
    %v75 = vsel %vm67, 1.0, 0.0
    %v76 = vsel %vm68, 1.0, 0.0
    %v77 = vsel %vm69, 1.0, 0.0
    %v78 = vpack.c.bf16 %v70, %v70
    %v79 = vpack.c.bf16 %v71, %v71
    %v80 = vpack.c.bf16 %v72, %v72
    %v81 = vpack.c.bf16 %v73, %v73
    %v82 = vpack.c.bf16 %v74, %v74
    %v83 = vpack.c.bf16 %v75, %v75
    %v84 = vpack.c.bf16 %v76, %v76
    %v85 = vpack.c.bf16 %v77, %v77
    %v86 = vld [vmem:[%s1] sm:$0x1]
    %v87 = vshra.s32 %v26, 3
    %v88 = vshra.s32 %v27, 3
    %v89 = vand.u32 %v43, 15
    %v90 = vshra.s32 %v89, 3
    %vm91 = vcmp.eq.s32.totalorder %v87, %v90
    %vm92 = vcmp.eq.s32.totalorder %v88, %v90
    %vm93 = vcmp.gt.f32.partialorder %v86, 0.5
    %v94 = vsel %vm93, 1, 0
    %v95 = vperm.slane %v94, 0
    %vm96 = vcmp.eq.s32.totalorder %v95, 1
    %vm97 = vmand %vm91, %vm96
    %vm98 = vmand %vm92, %vm96
    %v99 = vsel %vm97, 0.0, -10000.0
    %v100 = vsel %vm98, 0.0, -10000.0
    %v101 = vld [vmem:[%s0] sm:$0xff]
    %v102 = vld [vmem:[%s0 + $0x8] sm:$0xff]
    %v103 = vld [vmem:[%s5] sm:$0x1]
    %v104 = vld [vmem:[%s5 + $0x1] sm:$0x1]
    %vm105 = vcmask 261120
    %v106 = vsel %vm105, %v101, 0.0
    %107 = vadd.xlane.f32.xlu0 %v106
    %v108 = vpop.xlane.xlu0 %107
    %v109 = vsel %vm105, %v102, 0.0
    %110 = vadd.xlane.f32.xlu0 %v109
    %v111 = vpop.xlane.xlu0 %110
    %v112 = vrcp.pop 32.0
    %v113 = vmul.f32 32.0, %v112
    %v114 = vsub.f32 1.0, %v113
    %v115 = vmul.f32 %v112, %v114
    %v116 = vadd.f32 %v112, %v115
    %vm117 = vweird.f32 %v112
    %v118 = vsel %vm117, %v112, %v116
    %v119 = vmul.f32 %v108, %v118
    %v120 = vmul.f32 %v111, %v118
    %v121 = vsub.f32 %v101, %v119
    %v122 = vsub.f32 %v102, %v120
    %v123 = vmul.f32 %v121, %v121
    %v124 = vmul.f32 %v122, %v122
    %v125 = vsel %vm105, %v123, 0.0
    %126 = vadd.xlane.f32.xlu0 %v125
    %v127 = vpop.xlane.xlu0 %126
    %v128 = vsel %vm105, %v124, 0.0
    %129 = vadd.xlane.f32.xlu0 %v128
    %v130 = vpop.xlane.xlu0 %129
    %v131 = vmul.f32 %v127, %v118
    %v132 = vmul.f32 %v130, %v118
    %v133 = vadd.f32 %v131, 1e-12
    %v134 = vadd.f32 %v132, 1e-12
    %v135 = vrsqrt.pop %v133
    %v136 = vmul.f32 %v135, %v133
    %v137 = vmul.f32 %v136, %v135
    %v138 = vmul.f32 0.5, %v137
    %v139 = vsub.f32 1.5, %v138
    %v140 = vmul.f32 %v135, %v139
    %vm141 = vweird.f32 %v133
    %vm142 = vweird.f32 %v135
    %vm143 = vmor %vm141, %vm142
    %v144 = vsel %vm143, %v135, %v140
    %v145 = vrsqrt.pop %v134
    %v146 = vmul.f32 %v145, %v134
    %v147 = vmul.f32 %v146, %v145
    %v148 = vmul.f32 0.5, %v147
    %v149 = vsub.f32 1.5, %v148
    %v150 = vmul.f32 %v145, %v149
    %vm151 = vweird.f32 %v134
    %vm152 = vweird.f32 %v145
    %vm153 = vmor %vm151, %vm152
    %v154 = vsel %vm153, %v145, %v150
    %v155 = vmul.f32 %v121, %v144
    %v156 = vmul.f32 %v122, %v154
    %v157 = vperm.slane %v103, 0
    %v158 = vmul.f32 %v155, %v157
    %v159 = vmul.f32 %v156, %v157
    %v160 = vperm.slane %v104, 0
    %v161 = vadd.f32 %v158, %v160
    %v162 = vadd.f32 %v159, %v160
    %v163 = vld [vmem:[%s2] sm:$0xff]
    %v164 = vld [vmem:[%s2 + $0x8] sm:$0xff]
    %v165 = vld [vmem:[%s2 + $0x10] sm:$0xff]
    %v166 = vld [vmem:[%s2 + $0x18] sm:$0xff]
    %v167 = vld [vmem:[%s3] sm:$0xf]
    %v168 = vld [vmem:[%s3 + $0x4] sm:$0xf]
    %v169 = vld [vmem:[%s3 + $0x8] sm:$0xf]
    %v170 = vld [vmem:[%s3 + $0xc] sm:$0xf]
    %v171 = vld [vmem:[%s3 + $0x10] sm:$0xf]
    %v172 = vld [vmem:[%s3 + $0x14] sm:$0xf]
    %v173 = vld [vmem:[%s3 + $0x18] sm:$0xf]
    %v174 = vld [vmem:[%s3 + $0x1c] sm:$0xf]
    %v175 = vld [vmem:[%s5 + $0x2] sm:$0x1]
    %v176 = vld [vmem:[%s5 + $0x3] sm:$0x1]
    %v177 = vld [vmem:[%s5 + $0x4] sm:$0x1]
    %v178 = vld [vmem:[%s5 + $0x5] sm:$0x1]
    %v179 = vld [vmem:[%s5 + $0x6] sm:$0x1]
    %v180 = vld [vmem:[%s5 + $0x7] sm:$0x1]
    %v181 = vld [vmem:[%s5 + $0x8] sm:$0x1]
    %v182 = vld [vmem:[%s5 + $0x9] sm:$0x1]
    %v183 = vpack.c.bf16 %v162, %v161
    %v184 = vperm.slane %v175, 0
    %v189 = vunpack.c.l.b16 %v163
    %v190 = vunpack.c.l.b16 %v164
    %v191 = vunpack.c.l.b16 %v165
    %v192 = vunpack.c.l.b16 %v166
    %v193 = vpack.c.b16 %v190, %v189
    %v194 = vpack.c.b16 %v192, %v191
    %v198 = vsel %vm105, %v183, 0
    %200 = vmatpush.bf16.msra.mxu0 0
    %201 = vmatpush.bf16.msra.mxu0 0
    %202 = vmatpush.bf16.msra.mxu0 0
    %203 = vmatpush.bf16.msra.mxu0 0
    %204 = vmatpush.bf16.msra.mxu0 0
    %205 = vmatpush.bf16.msra.mxu0 0
    %206 = vmatpush.bf16.msra.mxu0 %v194
    %207 = vmatpush.bf16.msra.mxu0 %v193
    %208 = vmatmul.bf16.gmra.mxu0 %v198
    %v209 = vpop.f32.mrf.mxu0
    %v210 = vadd.f32 %v184, %v209
    %v211 = vpop.f32.mrf.mxu0
    %v212 = vadd.f32 %v184, %v211
    %213 = vdwg.mxu0
    %v214 = vpack.c.bf16 %v210, %v210
    %v215 = vpack.c.bf16 %v212, %v212
    %v216 = vunpack.c.l.bf16 %v214
    %v217 = vunpack.c.l.bf16 %v215
    %v218 = vunpack.c.l.bf16 %v78
    %v219 = vunpack.c.l.bf16 %v79
    %v220 = vunpack.c.l.bf16 %v80
    %v221 = vunpack.c.l.bf16 %v81
    %v222 = vunpack.c.l.bf16 %v82
    %v223 = vunpack.c.l.bf16 %v83
    %v224 = vunpack.c.l.bf16 %v84
    %v225 = vunpack.c.l.bf16 %v85
    %234 = vrot.lane.b32.xlu0 %v218, 32
    %v235 = vpop.permute.xlu0 %234
    %236 = vrot.lane.b32.xlu0 %v219, 32
    %v237 = vpop.permute.xlu0 %236
    %238 = vrot.lane.b32.xlu0 %v220, 32
    %v239 = vpop.permute.xlu0 %238
    %240 = vrot.lane.b32.xlu0 %v221, 32
    %v241 = vpop.permute.xlu0 %240
    %242 = vrot.lane.b32.xlu0 %v222, 32
    %v243 = vpop.permute.xlu0 %242
    %244 = vrot.lane.b32.xlu0 %v223, 32
    %v245 = vpop.permute.xlu0 %244
    %246 = vrot.lane.b32.xlu0 %v224, 32
    %v247 = vpop.permute.xlu0 %246
    %248 = vrot.lane.b32.xlu0 %v225, 32
    %v249 = vpop.permute.xlu0 %248
    %v258 = vmul.f32 %v216, %v235
    %v259 = vmul.f32 %v217, %v237
    %v260 = vmul.f32 %v216, %v239
    %v261 = vmul.f32 %v217, %v241
    %v262 = vmul.f32 %v216, %v243
    %v263 = vmul.f32 %v217, %v245
    %v264 = vmul.f32 %v216, %v247
    %v265 = vmul.f32 %v217, %v249
    %v266 = vpack.c.bf16 %v259, %v258
    %v267 = vpack.c.bf16 %v261, %v260
    %v268 = vpack.c.bf16 %v263, %v262
    %v269 = vpack.c.bf16 %v265, %v264
    %270 = vrot.lane.b32.xlu0 %v218, 64
    %v271 = vpop.permute.xlu0 %270
    %272 = vrot.lane.b32.xlu0 %v219, 64
    %v273 = vpop.permute.xlu0 %272
    %274 = vrot.lane.b32.xlu0 %v220, 64
    %v275 = vpop.permute.xlu0 %274
    %276 = vrot.lane.b32.xlu0 %v221, 64
    %v277 = vpop.permute.xlu0 %276
    %278 = vrot.lane.b32.xlu0 %v222, 64
    %v279 = vpop.permute.xlu0 %278
    %280 = vrot.lane.b32.xlu0 %v223, 64
    %v281 = vpop.permute.xlu0 %280
    %282 = vrot.lane.b32.xlu0 %v224, 64
    %v283 = vpop.permute.xlu0 %282
    %284 = vrot.lane.b32.xlu0 %v225, 64
    %v285 = vpop.permute.xlu0 %284
    %v294 = vmul.f32 %v216, %v271
    %v295 = vmul.f32 %v217, %v273
    %v296 = vmul.f32 %v216, %v275
    %v297 = vmul.f32 %v217, %v277
    %v298 = vmul.f32 %v216, %v279
    %v299 = vmul.f32 %v217, %v281
    %v300 = vmul.f32 %v216, %v283
    %v301 = vmul.f32 %v217, %v285
    %v302 = vpack.c.bf16 %v295, %v294
    %v303 = vpack.c.bf16 %v297, %v296
    %v304 = vpack.c.bf16 %v299, %v298
    %v305 = vpack.c.bf16 %v301, %v300
    %v306 = vpack.c.bf16 %v212, %v210
    %311 = vrot.lane.b32.xlu0 %v266, 96
    %v312 = vpop.permute.xlu0 %311
    %313 = vrot.lane.b32.xlu0 %v267, 96
    %v314 = vpop.permute.xlu0 %313
    %315 = vrot.lane.b32.xlu0 %v268, 96
    %v316 = vpop.permute.xlu0 %315
    %317 = vrot.lane.b32.xlu0 %v269, 96
    %v318 = vpop.permute.xlu0 %317
    %v320 = vsel %vm105, %v306, 0
    %v323 = vsel %vm105, %v312, 0
    %v326 = vsel %vm105, %v314, 0
    %v329 = vsel %vm105, %v316, 0
    %v332 = vsel %vm105, %v318, 0
    %334 = vmatpush.bf16.xpose.msra.mxu0 0
    %335 = vmatpush.bf16.xpose.msra.mxu0 0
    %336 = vmatpush.bf16.xpose.msra.mxu0 0
    %337 = vmatpush.bf16.xpose.msra.mxu0 0
    %338 = vmatpush.bf16.xpose.msra.mxu0 %v332
    %339 = vmatpush.bf16.xpose.msra.mxu0 %v329
    %340 = vmatpush.bf16.xpose.msra.mxu0 %v326
    %341 = vmatpush.bf16.xpose.msra.mxu0 %v323
    %342 = vmatmul.bf16.gmra.mxu0 %v320
    %v343 = vpop.f32.mrf.mxu0
    %v344 = vadd.f32 0.0, %v343
    %v345 = vpop.f32.mrf.mxu0
    %v346 = vadd.f32 0.0, %v345
    %347 = vdwg.mxu0
    %v348 = vmul.f32 %v344, 0.35355338
    %v349 = vmul.f32 %v346, 0.35355338
    %v350 = vadd.f32 %v348, %v99
    %v351 = vadd.f32 %v349, %v100
    %vm352 = vcmask 523264
    %v353 = vsel %vm352, %v350, -inf
    %354 = vmax.xlane.f32.xlu0 %v353
    %v355 = vpop.xlane.xlu0 %354
    %v356 = vsel %vm352, %v351, -inf
    %357 = vmax.xlane.f32.xlu0 %v356
    %v358 = vpop.xlane.xlu0 %357
    %v359 = vsub.f32 %v350, %v355
    %v360 = vsub.f32 %v351, %v358
    %v361 = vmul.f32 %v359, 1.442695
    %v362 = vpow.pop %v361
    %v363 = vmul.f32 %v360, 1.442695
    %v364 = vpow.pop %v363
    %v366 = vsel %vm352, %v362, 0
    %v369 = vsel %vm352, %v364, 0
    %371 = vmatpush.msra.mxu0 0.0
    %372 = vmatpush.msra.mxu0 0.0
    %373 = vmatpush.msra.mxu0 0.0
    %374 = vmatpush.msra.mxu0 0.0
    %375 = vmatpush.msra.mxu0 0.0
    %376 = vmatpush.msra.mxu0 0.0
    %377 = vmatpush.msra.mxu0 0.0
    %378 = vmatpush.msra.mxu0 0.0
    %379 = vmatpush.msra.mxu0 %v60
    %380 = vmatpush.msra.mxu0 %v59
    %381 = vmatpush.msra.mxu0 %v58
    %382 = vmatpush.msra.mxu0 %v57
    %383 = vmatpush.msra.mxu0 %v56
    %384 = vmatpush.msra.mxu0 %v55
    %385 = vmatpush.msra.mxu0 %v54
    %386 = vmatpush.msra.mxu0 %v53
    %387 = vmatmul.f32.gmra.mxu0 %v366
    %v388 = vpop.f32.mrf.mxu0
    %v389 = vadd.f32 0.0, %v388
    %390 = vmatmul.f32.gmra.mxu0 %v369
    %v391 = vpop.f32.mrf.mxu0
    %v392 = vadd.f32 0.0, %v391
    %393 = vdwg.mxu0
    %v394 = vrcp.pop %v389
    %v395 = vrcp.pop %v392
    %v396 = vmul.f32 %v362, %v394
    %v397 = vmul.f32 %v364, %v395
    %v398 = vpack.c.bf16 %v397, %v396
    %403 = vrot.lane.b32.xlu0 %v302, 64
    %v404 = vpop.permute.xlu0 %403
    %405 = vrot.lane.b32.xlu0 %v303, 64
    %v406 = vpop.permute.xlu0 %405
    %407 = vrot.lane.b32.xlu0 %v304, 64
    %v408 = vpop.permute.xlu0 %407
    %409 = vrot.lane.b32.xlu0 %v305, 64
    %v410 = vpop.permute.xlu0 %409
    %v416 = vsel %vm352, %v398, 0
    %418 = vmatpush.bf16.msra.mxu0 0
    %419 = vmatpush.bf16.msra.mxu0 0
    %420 = vmatpush.bf16.msra.mxu0 0
    %421 = vmatpush.bf16.msra.mxu0 0
    %422 = vmatpush.bf16.msra.mxu0 %v410
    %423 = vmatpush.bf16.msra.mxu0 %v408
    %424 = vmatpush.bf16.msra.mxu0 %v406
    %425 = vmatpush.bf16.msra.mxu0 %v404
    %426 = vmatmul.bf16.gmra.mxu0 %v416
    %v427 = vpop.f32.mrf.mxu0
    %v428 = vadd.f32 0.0, %v427
    %v429 = vpop.f32.mrf.mxu0
    %v430 = vadd.f32 0.0, %v429
    %431 = vdwg.mxu0
    %v432 = vpack.c.bf16 %v430, %v428
    %v433 = vperm.slane %v176, 0
    %434 = vrot.lane.b32.xlu0 %v193, 32
    %v435 = vpop.permute.xlu0 %434
    %436 = vrot.lane.b32.xlu0 %v194, 32
    %v437 = vpop.permute.xlu0 %436
    %v441 = vsel %vm105, %v432, 0
    %443 = vmatpush.bf16.msra.mxu0 0
    %444 = vmatpush.bf16.msra.mxu0 0
    %445 = vmatpush.bf16.msra.mxu0 0
    %446 = vmatpush.bf16.msra.mxu0 0
    %447 = vmatpush.bf16.msra.mxu0 0
    %448 = vmatpush.bf16.msra.mxu0 0
    %449 = vmatpush.bf16.msra.mxu0 %v437
    %450 = vmatpush.bf16.msra.mxu0 %v435
    %451 = vmatmul.bf16.gmra.mxu0 %v441
    %v452 = vpop.f32.mrf.mxu0
    %v453 = vadd.f32 %v433, %v452
    %v454 = vpop.f32.mrf.mxu0
    %v455 = vadd.f32 %v433, %v454
    %456 = vdwg.mxu0
    %v457 = vadd.f32 %v453, %v161
    %v458 = vadd.f32 %v455, %v162
    %v459 = vsel %vm105, %v457, 0.0
    %460 = vadd.xlane.f32.xlu0 %v459
    %v461 = vpop.xlane.xlu0 %460
    %v462 = vsel %vm105, %v458, 0.0
    %463 = vadd.xlane.f32.xlu0 %v462
    %v464 = vpop.xlane.xlu0 %463
    %v465 = vmul.f32 %v461, %v118
    %v466 = vmul.f32 %v464, %v118
    %v467 = vsub.f32 %v457, %v465
    %v468 = vsub.f32 %v458, %v466
    %v469 = vmul.f32 %v467, %v467
    %v470 = vmul.f32 %v468, %v468
    %v471 = vsel %vm105, %v469, 0.0
    %472 = vadd.xlane.f32.xlu0 %v471
    %v473 = vpop.xlane.xlu0 %472
    %v474 = vsel %vm105, %v470, 0.0
    %475 = vadd.xlane.f32.xlu0 %v474
    %v476 = vpop.xlane.xlu0 %475
    %v477 = vmul.f32 %v473, %v118
    %v478 = vmul.f32 %v476, %v118
    %v479 = vadd.f32 %v477, 1e-12
    %v480 = vadd.f32 %v478, 1e-12
    %v481 = vrsqrt.pop %v479
    %v482 = vmul.f32 %v481, %v479
    %v483 = vmul.f32 %v482, %v481
    %v484 = vmul.f32 0.5, %v483
    %v485 = vsub.f32 1.5, %v484
    %v486 = vmul.f32 %v481, %v485
    %vm487 = vweird.f32 %v479
    %vm488 = vweird.f32 %v481
    %vm489 = vmor %vm487, %vm488
    %v490 = vsel %vm489, %v481, %v486
    %v491 = vrsqrt.pop %v480
    %v492 = vmul.f32 %v491, %v480
    %v493 = vmul.f32 %v492, %v491
    %v494 = vmul.f32 0.5, %v493
    %v495 = vsub.f32 1.5, %v494
    %v496 = vmul.f32 %v491, %v495
    %vm497 = vweird.f32 %v480
    %vm498 = vweird.f32 %v491
    %vm499 = vmor %vm497, %vm498
    %v500 = vsel %vm499, %v491, %v496
    %v501 = vmul.f32 %v467, %v490
    %v502 = vmul.f32 %v468, %v500
    %v503 = vperm.slane %v177, 0
    %v504 = vmul.f32 %v501, %v503
    %v505 = vmul.f32 %v502, %v503
    %v506 = vperm.slane %v178, 0
    %v507 = vadd.f32 %v504, %v506
    %v508 = vadd.f32 %v505, %v506
    %v509 = vpack.c.bf16 %v508, %v507
    %v510 = vperm.slane %v179, 0
    %v511 = vunpack.c.h.b16 %v163
    %v512 = vunpack.c.h.b16 %v164
    %v513 = vunpack.c.h.b16 %v165
    %v514 = vunpack.c.h.b16 %v166
    %v515 = vpack.c.b16 %v512, %v511
    %v516 = vpack.c.b16 %v514, %v513
    %v520 = vsel %vm105, %v509, 0
    %522 = vmatpush.bf16.msra.mxu0 0
    %523 = vmatpush.bf16.msra.mxu0 0
    %524 = vmatpush.bf16.msra.mxu0 0
    %525 = vmatpush.bf16.msra.mxu0 0
    %526 = vmatpush.bf16.msra.mxu0 0
    %527 = vmatpush.bf16.msra.mxu0 0
    %528 = vmatpush.bf16.msra.mxu0 %v516
    %529 = vmatpush.bf16.msra.mxu0 %v515
    %530 = vmatmul.bf16.gmra.mxu0 %v520
    %v531 = vpop.f32.mrf.mxu0
    %v532 = vadd.f32 %v510, %v531
    %v533 = vpop.f32.mrf.mxu0
    %v534 = vadd.f32 %v510, %v533
    %535 = vdwg.mxu0
    %v536 = vmul.f32 %v532, 0.5
    %v537 = vmul.f32 %v534, 0.5
    %v538 = vmul.f32 %v532, 0.044715
    %v539 = vmul.f32 %v534, 0.044715
    %v540 = vmul.f32 %v538, %v532
    %v541 = vmul.f32 %v539, %v534
    %v542 = vmul.f32 %v540, %v532
    %v543 = vmul.f32 %v541, %v534
    %v544 = vadd.f32 %v532, %v542
    %v545 = vadd.f32 %v534, %v543
    %v546 = vmul.f32 %v544, 0.7978846
    %v547 = vmul.f32 %v545, 0.7978846
    %v548 = vtanh.pop %v546
    %v549 = vtanh.pop %v547
    %v550 = vadd.f32 %v548, 1.0
    %v551 = vadd.f32 %v549, 1.0
    %v552 = vmul.f32 %v536, %v550
    %v553 = vmul.f32 %v537, %v551
    %v554 = vpack.c.bf16 %v553, %v552
    %v555 = vperm.slane %v180, 0
    %v564 = vunpack.c.l.b16 %v167
    %v565 = vunpack.c.l.b16 %v168
    %v566 = vunpack.c.l.b16 %v169
    %v567 = vunpack.c.l.b16 %v170
    %v568 = vunpack.c.l.b16 %v171
    %v569 = vunpack.c.l.b16 %v172
    %v570 = vunpack.c.l.b16 %v173
    %v571 = vunpack.c.l.b16 %v174
    %v572 = vpack.c.b16 %v565, %v564
    %v573 = vpack.c.b16 %v567, %v566
    %v574 = vpack.c.b16 %v569, %v568
    %v575 = vpack.c.b16 %v571, %v570
    %v581 = vsel %vm352, %v554, 0
    %583 = vmatpush.bf16.msra.mxu0 0
    %584 = vmatpush.bf16.msra.mxu0 0
    %585 = vmatpush.bf16.msra.mxu0 0
    %586 = vmatpush.bf16.msra.mxu0 0
    %587 = vmatpush.bf16.msra.mxu0 %v575
    %588 = vmatpush.bf16.msra.mxu0 %v574
    %589 = vmatpush.bf16.msra.mxu0 %v573
    %590 = vmatpush.bf16.msra.mxu0 %v572
    %591 = vmatmul.bf16.gmra.mxu0 %v581
    %v592 = vpop.f32.mrf.mxu0
    %v593 = vadd.f32 %v555, %v592
    %v594 = vpop.f32.mrf.mxu0
    %v595 = vadd.f32 %v555, %v594
    %596 = vdwg.mxu0
    %v597 = vadd.f32 %v593, %v507
    %v598 = vadd.f32 %v595, %v508
    %v599 = vsel %vm105, %v597, 0.0
    %600 = vadd.xlane.f32.xlu0 %v599
    %v601 = vpop.xlane.xlu0 %600
    %v602 = vsel %vm105, %v598, 0.0
    %603 = vadd.xlane.f32.xlu0 %v602
    %v604 = vpop.xlane.xlu0 %603
    %v605 = vmul.f32 %v601, %v118
    %v606 = vmul.f32 %v604, %v118
    %v607 = vsub.f32 %v597, %v605
    %v608 = vsub.f32 %v598, %v606
    %v609 = vmul.f32 %v607, %v607
    %v610 = vmul.f32 %v608, %v608
    %v611 = vsel %vm105, %v609, 0.0
    %612 = vadd.xlane.f32.xlu0 %v611
    %v613 = vpop.xlane.xlu0 %612
    %v614 = vsel %vm105, %v610, 0.0
    %615 = vadd.xlane.f32.xlu0 %v614
    %v616 = vpop.xlane.xlu0 %615
    %v617 = vmul.f32 %v613, %v118
    %v618 = vmul.f32 %v616, %v118
    %v619 = vadd.f32 %v617, 1e-12
    %v620 = vadd.f32 %v618, 1e-12
    %v621 = vrsqrt.pop %v619
    %v622 = vmul.f32 %v621, %v619
    %v623 = vmul.f32 %v622, %v621
    %v624 = vmul.f32 0.5, %v623
    %v625 = vsub.f32 1.5, %v624
    %v626 = vmul.f32 %v621, %v625
    %vm627 = vweird.f32 %v619
    %vm628 = vweird.f32 %v621
    %vm629 = vmor %vm627, %vm628
    %v630 = vsel %vm629, %v621, %v626
    %v631 = vrsqrt.pop %v620
    %v632 = vmul.f32 %v631, %v620
    %v633 = vmul.f32 %v632, %v631
    %v634 = vmul.f32 0.5, %v633
    %v635 = vsub.f32 1.5, %v634
    %v636 = vmul.f32 %v631, %v635
    %vm637 = vweird.f32 %v620
    %vm638 = vweird.f32 %v631
    %vm639 = vmor %vm637, %vm638
    %v640 = vsel %vm639, %v631, %v636
    %v641 = vmul.f32 %v607, %v630
    %v642 = vmul.f32 %v608, %v640
    %v643 = vperm.slane %v181, 0
    %v644 = vmul.f32 %v641, %v643
    %v645 = vmul.f32 %v642, %v643
    %v646 = vperm.slane %v182, 0
    %v647 = vadd.f32 %v644, %v646
    %v648 = vadd.f32 %v645, %v646
    %s649 = scalar_lea.vmem %s2, 32
    %v650 = vld [vmem:[%s649] sm:$0xff]
    %v651 = vld [vmem:[%s649 + $0x8] sm:$0xff]
    %v652 = vld [vmem:[%s649 + $0x10] sm:$0xff]
    %v653 = vld [vmem:[%s649 + $0x18] sm:$0xff]
    %s654 = scalar_lea.vmem %s3, 32
    %v655 = vld [vmem:[%s654] sm:$0xf]
    %v656 = vld [vmem:[%s654 + $0x4] sm:$0xf]
    %v657 = vld [vmem:[%s654 + $0x8] sm:$0xf]
    %v658 = vld [vmem:[%s654 + $0xc] sm:$0xf]
    %v659 = vld [vmem:[%s654 + $0x10] sm:$0xf]
    %v660 = vld [vmem:[%s654 + $0x14] sm:$0xf]
    %v661 = vld [vmem:[%s654 + $0x18] sm:$0xf]
    %v662 = vld [vmem:[%s654 + $0x1c] sm:$0xf]
    %v663 = vld [vmem:[%s5 + $0xa] sm:$0x1]
    %v664 = vld [vmem:[%s5 + $0xb] sm:$0x1]
    %v665 = vld [vmem:[%s5 + $0xc] sm:$0x1]
    %v666 = vld [vmem:[%s5 + $0xd] sm:$0x1]
    %v667 = vld [vmem:[%s5 + $0xe] sm:$0x1]
    %v668 = vld [vmem:[%s5 + $0xf] sm:$0x1]
    %v669 = vld [vmem:[%s5 + $0x10] sm:$0x1]
    %v670 = vld [vmem:[%s5 + $0x11] sm:$0x1]
    %v671 = vpack.c.bf16 %v648, %v647
    %v672 = vperm.slane %v663, 0
    %v677 = vunpack.c.l.b16 %v650
    %v678 = vunpack.c.l.b16 %v651
    %v679 = vunpack.c.l.b16 %v652
    %v680 = vunpack.c.l.b16 %v653
    %v681 = vpack.c.b16 %v678, %v677
    %v682 = vpack.c.b16 %v680, %v679
    %v686 = vsel %vm105, %v671, 0
    %688 = vmatpush.bf16.msra.mxu0 0
    %689 = vmatpush.bf16.msra.mxu0 0
    %690 = vmatpush.bf16.msra.mxu0 0
    %691 = vmatpush.bf16.msra.mxu0 0
    %692 = vmatpush.bf16.msra.mxu0 0
    %693 = vmatpush.bf16.msra.mxu0 0
    %694 = vmatpush.bf16.msra.mxu0 %v682
    %695 = vmatpush.bf16.msra.mxu0 %v681
    %696 = vmatmul.bf16.gmra.mxu0 %v686
    %v697 = vpop.f32.mrf.mxu0
    %v698 = vadd.f32 %v672, %v697
    %v699 = vpop.f32.mrf.mxu0
    %v700 = vadd.f32 %v672, %v699
    %701 = vdwg.mxu0
    %v702 = vpack.c.bf16 %v698, %v698
    %v703 = vpack.c.bf16 %v700, %v700
    %v704 = vunpack.c.l.bf16 %v702
    %v705 = vunpack.c.l.bf16 %v703
    %v706 = vmul.f32 %v704, %v235
    %v707 = vmul.f32 %v705, %v237
    %v708 = vmul.f32 %v704, %v239
    %v709 = vmul.f32 %v705, %v241
    %v710 = vmul.f32 %v704, %v243
    %v711 = vmul.f32 %v705, %v245
    %v712 = vmul.f32 %v704, %v247
    %v713 = vmul.f32 %v705, %v249
    %v714 = vpack.c.bf16 %v707, %v706
    %v715 = vpack.c.bf16 %v709, %v708
    %v716 = vpack.c.bf16 %v711, %v710
    %v717 = vpack.c.bf16 %v713, %v712
    %v718 = vmul.f32 %v704, %v271
    %v719 = vmul.f32 %v705, %v273
    %v720 = vmul.f32 %v704, %v275
    %v721 = vmul.f32 %v705, %v277
    %v722 = vmul.f32 %v704, %v279
    %v723 = vmul.f32 %v705, %v281
    %v724 = vmul.f32 %v704, %v283
    %v725 = vmul.f32 %v705, %v285
    %v726 = vpack.c.bf16 %v719, %v718
    %v727 = vpack.c.bf16 %v721, %v720
    %v728 = vpack.c.bf16 %v723, %v722
    %v729 = vpack.c.bf16 %v725, %v724
    %v730 = vpack.c.bf16 %v700, %v698
    %735 = vrot.lane.b32.xlu0 %v714, 96
    %v736 = vpop.permute.xlu0 %735
    %737 = vrot.lane.b32.xlu0 %v715, 96
    %v738 = vpop.permute.xlu0 %737
    %739 = vrot.lane.b32.xlu0 %v716, 96
    %v740 = vpop.permute.xlu0 %739
    %741 = vrot.lane.b32.xlu0 %v717, 96
    %v742 = vpop.permute.xlu0 %741
    %v744 = vsel %vm105, %v730, 0
    %v747 = vsel %vm105, %v736, 0
    %v750 = vsel %vm105, %v738, 0
    %v753 = vsel %vm105, %v740, 0
    %v756 = vsel %vm105, %v742, 0
    %758 = vmatpush.bf16.xpose.msra.mxu0 0
    %759 = vmatpush.bf16.xpose.msra.mxu0 0
    %760 = vmatpush.bf16.xpose.msra.mxu0 0
    %761 = vmatpush.bf16.xpose.msra.mxu0 0
    %762 = vmatpush.bf16.xpose.msra.mxu0 %v756
    %763 = vmatpush.bf16.xpose.msra.mxu0 %v753
    %764 = vmatpush.bf16.xpose.msra.mxu0 %v750
    %765 = vmatpush.bf16.xpose.msra.mxu0 %v747
    %766 = vmatmul.bf16.gmra.mxu0 %v744
    %v767 = vpop.f32.mrf.mxu0
    %v768 = vadd.f32 0.0, %v767
    %v769 = vpop.f32.mrf.mxu0
    %v770 = vadd.f32 0.0, %v769
    %771 = vdwg.mxu0
    %v772 = vmul.f32 %v768, 0.35355338
    %v773 = vmul.f32 %v770, 0.35355338
    %v774 = vadd.f32 %v772, %v99
    %v775 = vadd.f32 %v773, %v100
    %v776 = vsel %vm352, %v774, -inf
    %777 = vmax.xlane.f32.xlu0 %v776
    %v778 = vpop.xlane.xlu0 %777
    %v779 = vsel %vm352, %v775, -inf
    %780 = vmax.xlane.f32.xlu0 %v779
    %v781 = vpop.xlane.xlu0 %780
    %v782 = vsub.f32 %v774, %v778
    %v783 = vsub.f32 %v775, %v781
    %v784 = vmul.f32 %v782, 1.442695
    %v785 = vpow.pop %v784
    %v786 = vmul.f32 %v783, 1.442695
    %v787 = vpow.pop %v786
    %v789 = vsel %vm352, %v785, 0
    %v792 = vsel %vm352, %v787, 0
    %794 = vmatpush.msra.mxu0 0.0
    %795 = vmatpush.msra.mxu0 0.0
    %796 = vmatpush.msra.mxu0 0.0
    %797 = vmatpush.msra.mxu0 0.0
    %798 = vmatpush.msra.mxu0 0.0
    %799 = vmatpush.msra.mxu0 0.0
    %800 = vmatpush.msra.mxu0 0.0
    %801 = vmatpush.msra.mxu0 0.0
    %802 = vmatpush.msra.mxu0 %v60
    %803 = vmatpush.msra.mxu0 %v59
    %804 = vmatpush.msra.mxu0 %v58
    %805 = vmatpush.msra.mxu0 %v57
    %806 = vmatpush.msra.mxu0 %v56
    %807 = vmatpush.msra.mxu0 %v55
    %808 = vmatpush.msra.mxu0 %v54
    %809 = vmatpush.msra.mxu0 %v53
    %810 = vmatmul.f32.gmra.mxu0 %v789
    %v811 = vpop.f32.mrf.mxu0
    %v812 = vadd.f32 0.0, %v811
    %813 = vmatmul.f32.gmra.mxu0 %v792
    %v814 = vpop.f32.mrf.mxu0
    %v815 = vadd.f32 0.0, %v814
    %816 = vdwg.mxu0
    %v817 = vrcp.pop %v812
    %v818 = vrcp.pop %v815
    %v819 = vmul.f32 %v785, %v817
    %v820 = vmul.f32 %v787, %v818
    %v821 = vpack.c.bf16 %v820, %v819
    %826 = vrot.lane.b32.xlu0 %v726, 64
    %v827 = vpop.permute.xlu0 %826
    %828 = vrot.lane.b32.xlu0 %v727, 64
    %v829 = vpop.permute.xlu0 %828
    %830 = vrot.lane.b32.xlu0 %v728, 64
    %v831 = vpop.permute.xlu0 %830
    %832 = vrot.lane.b32.xlu0 %v729, 64
    %v833 = vpop.permute.xlu0 %832
    %v839 = vsel %vm352, %v821, 0
    %841 = vmatpush.bf16.msra.mxu0 0
    %842 = vmatpush.bf16.msra.mxu0 0
    %843 = vmatpush.bf16.msra.mxu0 0
    %844 = vmatpush.bf16.msra.mxu0 0
    %845 = vmatpush.bf16.msra.mxu0 %v833
    %846 = vmatpush.bf16.msra.mxu0 %v831
    %847 = vmatpush.bf16.msra.mxu0 %v829
    %848 = vmatpush.bf16.msra.mxu0 %v827
    %849 = vmatmul.bf16.gmra.mxu0 %v839
    %v850 = vpop.f32.mrf.mxu0
    %v851 = vadd.f32 0.0, %v850
    %v852 = vpop.f32.mrf.mxu0
    %v853 = vadd.f32 0.0, %v852
    %854 = vdwg.mxu0
    %v855 = vpack.c.bf16 %v853, %v851
    %v856 = vperm.slane %v664, 0
    %857 = vrot.lane.b32.xlu0 %v681, 32
    %v858 = vpop.permute.xlu0 %857
    %859 = vrot.lane.b32.xlu0 %v682, 32
    %v860 = vpop.permute.xlu0 %859
    %v864 = vsel %vm105, %v855, 0
    %866 = vmatpush.bf16.msra.mxu0 0
    %867 = vmatpush.bf16.msra.mxu0 0
    %868 = vmatpush.bf16.msra.mxu0 0
    %869 = vmatpush.bf16.msra.mxu0 0
    %870 = vmatpush.bf16.msra.mxu0 0
    %871 = vmatpush.bf16.msra.mxu0 0
    %872 = vmatpush.bf16.msra.mxu0 %v860
    %873 = vmatpush.bf16.msra.mxu0 %v858
    %874 = vmatmul.bf16.gmra.mxu0 %v864
    %v875 = vpop.f32.mrf.mxu0
    %v876 = vadd.f32 %v856, %v875
    %v877 = vpop.f32.mrf.mxu0
    %v878 = vadd.f32 %v856, %v877
    %879 = vdwg.mxu0
    %v880 = vadd.f32 %v876, %v647
    %v881 = vadd.f32 %v878, %v648
    %v882 = vsel %vm105, %v880, 0.0
    %883 = vadd.xlane.f32.xlu0 %v882
    %v884 = vpop.xlane.xlu0 %883
    %v885 = vsel %vm105, %v881, 0.0
    %886 = vadd.xlane.f32.xlu0 %v885
    %v887 = vpop.xlane.xlu0 %886
    %v888 = vmul.f32 %v884, %v118
    %v889 = vmul.f32 %v887, %v118
    %v890 = vsub.f32 %v880, %v888
    %v891 = vsub.f32 %v881, %v889
    %v892 = vmul.f32 %v890, %v890
    %v893 = vmul.f32 %v891, %v891
    %v894 = vsel %vm105, %v892, 0.0
    %895 = vadd.xlane.f32.xlu0 %v894
    %v896 = vpop.xlane.xlu0 %895
    %v897 = vsel %vm105, %v893, 0.0
    %898 = vadd.xlane.f32.xlu0 %v897
    %v899 = vpop.xlane.xlu0 %898
    %v900 = vmul.f32 %v896, %v118
    %v901 = vmul.f32 %v899, %v118
    %v902 = vadd.f32 %v900, 1e-12
    %v903 = vadd.f32 %v901, 1e-12
    %v904 = vrsqrt.pop %v902
    %v905 = vmul.f32 %v904, %v902
    %v906 = vmul.f32 %v905, %v904
    %v907 = vmul.f32 0.5, %v906
    %v908 = vsub.f32 1.5, %v907
    %v909 = vmul.f32 %v904, %v908
    %vm910 = vweird.f32 %v902
    %vm911 = vweird.f32 %v904
    %vm912 = vmor %vm910, %vm911
    %v913 = vsel %vm912, %v904, %v909
    %v914 = vrsqrt.pop %v903
    %v915 = vmul.f32 %v914, %v903
    %v916 = vmul.f32 %v915, %v914
    %v917 = vmul.f32 0.5, %v916
    %v918 = vsub.f32 1.5, %v917
    %v919 = vmul.f32 %v914, %v918
    %vm920 = vweird.f32 %v903
    %vm921 = vweird.f32 %v914
    %vm922 = vmor %vm920, %vm921
    %v923 = vsel %vm922, %v914, %v919
    %v924 = vmul.f32 %v890, %v913
    %v925 = vmul.f32 %v891, %v923
    %v926 = vperm.slane %v665, 0
    %v927 = vmul.f32 %v924, %v926
    %v928 = vmul.f32 %v925, %v926
    %v929 = vperm.slane %v666, 0
    %v930 = vadd.f32 %v927, %v929
    %v931 = vadd.f32 %v928, %v929
    %v932 = vpack.c.bf16 %v931, %v930
    %v933 = vperm.slane %v667, 0
    %v934 = vunpack.c.h.b16 %v650
    %v935 = vunpack.c.h.b16 %v651
    %v936 = vunpack.c.h.b16 %v652
    %v937 = vunpack.c.h.b16 %v653
    %v938 = vpack.c.b16 %v935, %v934
    %v939 = vpack.c.b16 %v937, %v936
    %v943 = vsel %vm105, %v932, 0
    %945 = vmatpush.bf16.msra.mxu0 0
    %946 = vmatpush.bf16.msra.mxu0 0
    %947 = vmatpush.bf16.msra.mxu0 0
    %948 = vmatpush.bf16.msra.mxu0 0
    %949 = vmatpush.bf16.msra.mxu0 0
    %950 = vmatpush.bf16.msra.mxu0 0
    %951 = vmatpush.bf16.msra.mxu0 %v939
    %952 = vmatpush.bf16.msra.mxu0 %v938
    %953 = vmatmul.bf16.gmra.mxu0 %v943
    %v954 = vpop.f32.mrf.mxu0
    %v955 = vadd.f32 %v933, %v954
    %v956 = vpop.f32.mrf.mxu0
    %v957 = vadd.f32 %v933, %v956
    %958 = vdwg.mxu0
    %v959 = vmul.f32 %v955, 0.5
    %v960 = vmul.f32 %v957, 0.5
    %v961 = vmul.f32 %v955, 0.044715
    %v962 = vmul.f32 %v957, 0.044715
    %v963 = vmul.f32 %v961, %v955
    %v964 = vmul.f32 %v962, %v957
    %v965 = vmul.f32 %v963, %v955
    %v966 = vmul.f32 %v964, %v957
    %v967 = vadd.f32 %v955, %v965
    %v968 = vadd.f32 %v957, %v966
    %v969 = vmul.f32 %v967, 0.7978846
    %v970 = vmul.f32 %v968, 0.7978846
    %v971 = vtanh.pop %v969
    %v972 = vtanh.pop %v970
    %v973 = vadd.f32 %v971, 1.0
    %v974 = vadd.f32 %v972, 1.0
    %v975 = vmul.f32 %v959, %v973
    %v976 = vmul.f32 %v960, %v974
    %v977 = vpack.c.bf16 %v976, %v975
    %v978 = vperm.slane %v668, 0
    %v987 = vunpack.c.l.b16 %v655
    %v988 = vunpack.c.l.b16 %v656
    %v989 = vunpack.c.l.b16 %v657
    %v990 = vunpack.c.l.b16 %v658
    %v991 = vunpack.c.l.b16 %v659
    %v992 = vunpack.c.l.b16 %v660
    %v993 = vunpack.c.l.b16 %v661
    %v994 = vunpack.c.l.b16 %v662
    %v995 = vpack.c.b16 %v988, %v987
    %v996 = vpack.c.b16 %v990, %v989
    %v997 = vpack.c.b16 %v992, %v991
    %v998 = vpack.c.b16 %v994, %v993
    %v1004 = vsel %vm352, %v977, 0
    %1006 = vmatpush.bf16.msra.mxu0 0
    %1007 = vmatpush.bf16.msra.mxu0 0
    %1008 = vmatpush.bf16.msra.mxu0 0
    %1009 = vmatpush.bf16.msra.mxu0 0
    %1010 = vmatpush.bf16.msra.mxu0 %v998
    %1011 = vmatpush.bf16.msra.mxu0 %v997
    %1012 = vmatpush.bf16.msra.mxu0 %v996
    %1013 = vmatpush.bf16.msra.mxu0 %v995
    %1014 = vmatmul.bf16.gmra.mxu0 %v1004
    %v1015 = vpop.f32.mrf.mxu0
    %v1016 = vadd.f32 %v978, %v1015
    %v1017 = vpop.f32.mrf.mxu0
    %v1018 = vadd.f32 %v978, %v1017
    %1019 = vdwg.mxu0
    %v1020 = vadd.f32 %v1016, %v930
    %v1021 = vadd.f32 %v1018, %v931
    %v1022 = vsel %vm105, %v1020, 0.0
    %1023 = vadd.xlane.f32.xlu0 %v1022
    %v1024 = vpop.xlane.xlu0 %1023
    %v1025 = vsel %vm105, %v1021, 0.0
    %1026 = vadd.xlane.f32.xlu0 %v1025
    %v1027 = vpop.xlane.xlu0 %1026
    %v1028 = vmul.f32 %v1024, %v118
    %v1029 = vmul.f32 %v1027, %v118
    %v1030 = vsub.f32 %v1020, %v1028
    %v1031 = vsub.f32 %v1021, %v1029
    %v1032 = vmul.f32 %v1030, %v1030
    %v1033 = vmul.f32 %v1031, %v1031
    %v1034 = vsel %vm105, %v1032, 0.0
    %1035 = vadd.xlane.f32.xlu0 %v1034
    %v1036 = vpop.xlane.xlu0 %1035
    %v1037 = vsel %vm105, %v1033, 0.0
    %1038 = vadd.xlane.f32.xlu0 %v1037
    %v1039 = vpop.xlane.xlu0 %1038
    %v1040 = vmul.f32 %v1036, %v118
    %v1041 = vmul.f32 %v1039, %v118
    %v1042 = vadd.f32 %v1040, 1e-12
    %v1043 = vadd.f32 %v1041, 1e-12
    %v1044 = vrsqrt.pop %v1042
    %v1045 = vmul.f32 %v1044, %v1042
    %v1046 = vmul.f32 %v1045, %v1044
    %v1047 = vmul.f32 0.5, %v1046
    %v1048 = vsub.f32 1.5, %v1047
    %v1049 = vmul.f32 %v1044, %v1048
    %vm1050 = vweird.f32 %v1042
    %vm1051 = vweird.f32 %v1044
    %vm1052 = vmor %vm1050, %vm1051
    %v1053 = vsel %vm1052, %v1044, %v1049
    %v1054 = vrsqrt.pop %v1043
    %v1055 = vmul.f32 %v1054, %v1043
    %v1056 = vmul.f32 %v1055, %v1054
    %v1057 = vmul.f32 0.5, %v1056
    %v1058 = vsub.f32 1.5, %v1057
    %v1059 = vmul.f32 %v1054, %v1058
    %vm1060 = vweird.f32 %v1043
    %vm1061 = vweird.f32 %v1054
    %vm1062 = vmor %vm1060, %vm1061
    %v1063 = vsel %vm1062, %v1054, %v1059
    %v1064 = vmul.f32 %v1030, %v1053
    %v1065 = vmul.f32 %v1031, %v1063
    %v1066 = vperm.slane %v669, 0
    %v1067 = vmul.f32 %v1064, %v1066
    %v1068 = vmul.f32 %v1065, %v1066
    %v1069 = vperm.slane %v670, 0
    %v1070 = vadd.f32 %v1067, %v1069
    %v1071 = vadd.f32 %v1068, %v1069
    %v1072 = vmul.u32 %v26, 8
    %vm1073 = vcmp.eq.s32.totalorder %v43, %v1072
    %v1074 = vsel %vm1073, 1.0, 0.0
    %vm1075 = vcmask 130048
    %v1077 = vsel %vm1075, %v1074, 0
    %1079 = vmatpush.msra.mxu0 0.0
    %1080 = vmatpush.msra.mxu0 0.0
    %1081 = vmatpush.msra.mxu0 0.0
    %1082 = vmatpush.msra.mxu0 0.0
    %1083 = vmatpush.msra.mxu0 0.0
    %1084 = vmatpush.msra.mxu0 0.0
    %1085 = vmatpush.msra.mxu0 0.0
    %1086 = vmatpush.msra.mxu0 0.0
    %1087 = vmatpush.msra.mxu0 0.0
    %1088 = vmatpush.msra.mxu0 0.0
    %1089 = vmatpush.msra.mxu0 0.0
    %1090 = vmatpush.msra.mxu0 0.0
    %1091 = vmatpush.msra.mxu0 0.0
    %1092 = vmatpush.msra.mxu0 0.0
    %1093 = vmatpush.msra.mxu0 %v1071
    %1094 = vmatpush.msra.mxu0 %v1070
    %1095 = vmatmul.f32.gmra.mxu0 %v1077
    %v1096 = vpop.f32.mrf.mxu0
    %v1097 = vadd.f32 0.0, %v1096
    %1098 = vdwg.mxu0
    %v1099 = vpack.c.bf16 %v1097, %v1097
    %v1100 = vld [vmem:[%s4] sm:$0xf]
    %v1101 = vld [vmem:[%s4 + $0x4] sm:$0xf]
    %v1102 = vld [vmem:[%s4 + $0x8] sm:$0xf]
    %v1103 = vld [vmem:[%s4 + $0xc] sm:$0xf]
    %v1104 = vld [vmem:[%s5 + $0x12] sm:$0x1]
    %v1105 = vperm.slane %v1104, 0
    %v1110 = vunpack.c.l.b16 %v1100
    %v1111 = vunpack.c.l.b16 %v1101
    %v1112 = vunpack.c.l.b16 %v1102
    %v1113 = vunpack.c.l.b16 %v1103
    %v1114 = vpack.c.b16 %v1111, %v1110
    %v1115 = vpack.c.b16 %v1113, %v1112
    %v1119 = vsel %vm105, %v1099, 0
    %1121 = vmatpush.bf16.msra.mxu0 0
    %1122 = vmatpush.bf16.msra.mxu0 0
    %1123 = vmatpush.bf16.msra.mxu0 0
    %1124 = vmatpush.bf16.msra.mxu0 0
    %1125 = vmatpush.bf16.msra.mxu0 0
    %1126 = vmatpush.bf16.msra.mxu0 0
    %1127 = vmatpush.bf16.msra.mxu0 %v1115
    %1128 = vmatpush.bf16.msra.mxu0 %v1114
    %1129 = vmatmul.bf16.gmra.mxu0 %v1119
    %v1130 = vpop.f32.mrf.mxu0
    %v1131 = vadd.f32 %v1105, %v1130
    %v1132 = vpop.f32.mrf.mxu0
    %1133 = vdwg.mxu0
    %v1134 = vtanh.pop %v1131
    %v1135 = vtanh.pop %v1134
    %vm1136 = vcmask 254976
    %1137 = vst.msk [vmem:[#allocation2] sm:$0x3] %vm1136, %v1135
    // Predicated region
    $region26: #{bert_classifier_forward.1} parent=1 // pred_check
      _
    $region27: #{bert_classifier_forward.1} parent=1 // pred_check_branch
      %1139 = sbr.rel (0) target = $region29
    $region28: #{bert_classifier_forward.1} parent=1 // pred_region
      %1141 = vsyncadd [#allocation3], 0
      %s1143 = sshll.u32 [#allocation2], 4
      %s1144 = int_to_ptr.vmem [resolvable:$true] %s1143
      %s1145 = sshll.u32 %s6, 4
      %s1146 = int_to_ptr.hbm [resolvable:$true] %s1145
      %1148 = dma.vmem_to_hbm [thread:$0]  %s1144, 32, %s1146, [#allocation3]
    $region29: #{bert_classifier_forward.1} parent=1 // pred_fallthru
      _
    // Predicated region
    $region30: #{bert_classifier_forward.1} parent=1 // pred_check
      _
    $region31: #{bert_classifier_forward.1} parent=1 // pred_check_branch
      %1150 = sbr.rel (0) target = $region33
    $region32: #{bert_classifier_forward.1} parent=1 // pred_region
      %1152 = dma.done [#allocation3], 32
    $region33: #{bert_classifier_forward.1} parent=1 // pred_fallthru
      _
    %1153 = vsyncpa [#allocation3], 1

</llo_original>
